<compile_context>
chip_gen: v7x
topology: tpu7x:2x2x1
jax: 0.10.0
libtpu: 0.0.40
codegen_flags: <defaults>
</compile_context>

<pallas_src>
import functools

import jax
import jax.numpy as jnp
from jax import lax
from jax.experimental import pallas as pl
from jax.experimental.pallas import tpu as pltpu


def _decoder_block_kernel(x_ref, a_up_ref, b1_ref, m_all_ref, pool_ref, out_ref, *, eps):
    # x_ref     : (B_blk, H, W*C_in)        lane-dense input rows (NHWC flattened over W,C)
    # a_up_ref  : (2*W*C_in, 2*Wo*C_in)     bf16 block RHS for ConvTranspose2d:
    #                                       [[A_even, A_odd2], [0, A_odd0]]
    # b1_ref    : (1, 2*Wo*C_in)            ConvTranspose2d bias tiled along W, both halves
    # m_all_ref : (4*Wo*C_in, 2*Wo*C_out)   bf16 block RHS for Conv2d (both row parities)
    # pool_ref  : (2*Wo*C_out, 2*Wo*C_out)  per-channel mean-pool matrix (incl. 1/(Ho*Wo))
    # out_ref   : (B_blk, H, 2*Wo*C_out)    even output rows in lanes [0,L), odd in [L,2L)
    B, H, K1 = x_ref.shape
    M = B * H

    x = x_ref[...].reshape(M, K1)                         # (M, K1) f32, images stacked in M

    # Per-image row bookkeeping inside the flattened M axis (no cross-image leakage).
    row = lax.broadcasted_iota(jnp.int32, (M, 1), 0)
    last_in_img = (row % H) == (H - 1)
    first_in_img = (row % H) == 0

    # x_dn[r] = next input row of the same image (zero past the image's last row).
    # (Shifted-slice + boundary mask; a pltpu.roll(axis=0) would move the shift to the XLU.)
    zx = jnp.zeros((1, K1), jnp.float32)
    x_dn = jnp.where(last_in_img, 0.0, jnp.concatenate([x[1:, :], zx], axis=0))
    xcat = jnp.concatenate([x, x_dn], axis=1)             # (M, 2*K1)

    # ---- ConvTranspose2d(k3, s2, p1, op1) + bias + ReLU: one bf16 MXU matmul ----
    # Sub-pixel row decomposition: h[:, :K1u] = even upsampled rows (2i), h[:, K1u:] = odd
    # rows (2i+1); per-tap accumulation is done inside the MXU via the block RHS.
    h = jnp.dot(xcat.astype(jnp.bfloat16), a_up_ref[...],
                preferred_element_type=jnp.float32) + b1_ref[...]
    h = jnp.maximum(h, 0.0)                               # (M, 2*K1u)

    K1u = h.shape[1] // 2
    h_even = h[:, :K1u]
    h_odd = h[:, K1u:]
    zh = jnp.zeros((1, K1u), jnp.float32)
    h_odd_up = jnp.where(first_in_img, 0.0,
                         jnp.concatenate([zh, h_odd[:-1, :]], axis=0))    # h row (2i - 1)
    h_even_dn = jnp.where(last_in_img, 0.0,
                          jnp.concatenate([h_even[1:, :], zh], axis=0))   # h row (2i + 2)
    hcat = jnp.concatenate([h_odd_up, h, h_even_dn], axis=1)              # (M, 4*K1u)

    # ---- Conv2d(C_in -> C_out, k3, s1, p1), both row parities in one bf16 MXU matmul ----
    # z[:, :L] = even output rows (2i), z[:, L:] = odd output rows (2i+1).
    # The Conv2d bias is omitted: InstanceNorm subtracts the per-channel mean, so a
    # per-channel constant has exactly zero effect on the output.
    z = jnp.dot(hcat.astype(jnp.bfloat16), m_all_ref[...],
                preferred_element_type=jnp.float32)       # (M, 2*L)

    # ---- InstanceNorm2d: per (n, c) over Ho*Wo positions, biased var, eps, no affine ----
    # One pass of row sums + sums-of-squares, then var = E[z^2] - mean^2 (single
    # mean-subtraction at the output write; no extra MXU round-trip on the critical path).
    L2 = z.shape[1]
    z3 = z.reshape(B, H, L2)
    s1 = jnp.sum(z3, axis=1)                              # (B, 2*L) per-image lane sums
    s2 = jnp.sum(z3 * z3, axis=1)
    mean = jnp.dot(s1, pool_ref[...], preferred_element_type=jnp.float32)   # (B, 2*L)
    ex2 = jnp.dot(s2, pool_ref[...], preferred_element_type=jnp.float32)
    var = ex2 - mean * mean
    inv = lax.rsqrt(var + eps)

    # ---- Dropout(0.25) ----
    # TODO(synk): dropout is inference-mode identity; training-mode Bernoulli mask +
    # 1/0.75 rescale (via pltpu.prng_seed / pltpu.prng_random_bits) is omitted.

    y = (z3 - mean[:, None, :]) * inv[:, None, :]
    out_ref[...] = y.astype(out_ref.dtype)


def _upsample_row_matrix(w1_t, kh, W, Wo):
    """(W*C, Wo*C) banded matrix A with A[iw*C+ci, ow*C+co] = w1_t[ci, co, kh, kw]
    whenever ow == 2*iw - 1 + kw (ConvTranspose2d(k3,s2,p1,op1) column mapping)."""
    C = w1_t.shape[0]
    ow_ids = jnp.arange(Wo)
    A = jnp.zeros((W * C, Wo * C), jnp.float32)
    for kw in range(3):
        cols = 2 * jnp.arange(W) - 1 + kw
        T = (cols[:, None] == ow_ids[None, :]).astype(jnp.float32)      # (W, Wo)
        A = A + jnp.kron(T, w1_t[:, :, kh, kw].astype(jnp.float32))
    return A


def _conv_row_matrices(w2_t, Wo):
    """(3, Wo*C_in, Wo*C_out): M[dh][(q+dw-1)*C_in+ci, q*C_out+co] = w2_t[co, ci, dh, dw]
    (3x3, stride 1, padding 1; column padding handled by omitting out-of-range bands)."""
    mats = []
    for dh in range(3):
        M = jnp.zeros((Wo * w2_t.shape[1], Wo * w2_t.shape[0]), jnp.float32)
        for dw in range(3):
            band = jnp.eye(Wo, k=1 - dw, dtype=jnp.float32)
            M = M + jnp.kron(band, w2_t[:, :, dh, dw].T.astype(jnp.float32))
        mats.append(M)
    return jnp.stack(mats, axis=0)


def _pick_batch_block(n, max_blk=16):
    """Largest divisor of n that is <= max_blk while keeping >= 2 grid steps (v7x: 2 TCs)."""
    if n <= 1:
        return 1
    best = 1
    for b in range(1, min(n // 2, max_blk) + 1):
        if n % b == 0:
            best = b
    return best


def decoder_block_forward_nhwc(x_nhwc, params, *, batch_block=None):
    """x_nhwc: (N, H, W, C_in) float32. Returns (N, 2H, 2W, C_out) float32 (NHWC)."""
    w1_t, b1, w2_t = params["w1"], params["b1"], params["w2"]
    N, H, W, C_in = x_nhwc.shape
    C_out = w2_t.shape[0]
    Ho, Wo = 2 * H, 2 * W
    K1 = W * C_in            # input lanes per row       (128 here)
    K1u = Wo * C_in          # upsampled lanes per row   (256 here)
    L = Wo * C_out           # output lanes per parity   (128 here)

    if batch_block is None:
        batch_block = _pick_batch_block(N)
    assert N % batch_block == 0, (N, batch_block)

    # Lane-dense input rows: (N, H, W*C_in).
    x_rows = x_nhwc.reshape(N, H, K1).astype(jnp.float32)

    # ---- Banded row matrices (built once, DMA'd once, resident in VMEM for all steps) ----
    # NOTE: these dense banded matrices are ~3/W dense and grow as (W*C)^2; fine at W=16
    # (~0.75 MB total in bf16) but for W >= 64 prefer a shifted-lane (roll) formulation or
    # blocking over W instead of widening them (VMEM / wasted-flop scaling, esp. on v7x).
    a_even = _upsample_row_matrix(w1_t, 1, W, Wo)   # even output rows  (kh == 1, x[i])
    a_odd2 = _upsample_row_matrix(w1_t, 2, W, Wo)   # odd rows, x[i]    (kh == 2)
    a_odd0 = _upsample_row_matrix(w1_t, 0, W, Wo)   # odd rows, x[i+1]  (kh == 0)
    a_up = jnp.zeros((2 * K1, 2 * K1u), jnp.float32)
    a_up = a_up.at[:K1, :K1u].set(a_even)
    a_up = a_up.at[:K1, K1u:].set(a_odd2)
    a_up = a_up.at[K1:, K1u:].set(a_odd0)
    a_up = a_up.astype(jnp.bfloat16)                # MXU is bf16-native; f32 accumulate

    m = _conv_row_matrices(w2_t, Wo)                # (3, Wo*C_in, Wo*C_out), one per kh tap
    m_all = jnp.zeros((4 * K1u, 2 * L), jnp.float32)
    # LHS lane blocks: [h_odd_up | h_even | h_odd | h_even_dn]; output: [z_even | z_odd].
    m_all = m_all.at[0 * K1u:1 * K1u, :L].set(m[0])     # h_odd_up  -> z_even
    m_all = m_all.at[1 * K1u:2 * K1u, :L].set(m[1])     # h_even    -> z_even
    m_all = m_all.at[1 * K1u:2 * K1u, L:].set(m[0])     # h_even    -> z_odd
    m_all = m_all.at[2 * K1u:3 * K1u, :L].set(m[2])     # h_odd     -> z_even
    m_all = m_all.at[2 * K1u:3 * K1u, L:].set(m[1])     # h_odd     -> z_odd
    m_all = m_all.at[3 * K1u:4 * K1u, L:].set(m[2])     # h_even_dn -> z_odd
    m_all = m_all.astype(jnp.bfloat16)

    b1b = jnp.tile(b1.astype(jnp.float32), 2 * Wo).reshape(1, 2 * K1u)

    lane_ch = jnp.arange(2 * L) % C_out
    pool = (lane_ch[:, None] == lane_ch[None, :]).astype(jnp.float32) / float(Ho * Wo)

    kernel = functools.partial(_decoder_block_kernel, eps=1e-5)

    out_rows = pl.pallas_call(
        kernel,
        out_shape=jax.ShapeDtypeStruct((N, H, 2 * L), jnp.float32),
        grid_spec=pltpu.PrefetchScalarGridSpec(
            num_scalar_prefetch=0,
            grid=(N // batch_block,),
            in_specs=[
                pl.BlockSpec((batch_block, H, K1), lambda n: (n, 0, 0)),
                pl.BlockSpec((2 * K1, 2 * K1u), lambda n: (0, 0)),
                pl.BlockSpec((1, 2 * K1u), lambda n: (0, 0)),
                pl.BlockSpec((4 * K1u, 2 * L), lambda n: (0, 0)),
                pl.BlockSpec((2 * L, 2 * L), lambda n: (0, 0)),
            ],
            out_specs=pl.BlockSpec((batch_block, H, 2 * L), lambda n: (n, 0, 0)),
        ),
        compiler_params=pltpu.CompilerParams(
            dimension_semantics=("parallel",)),
    )(x_rows, a_up, b1b, m_all, pool)

    # Lanes [0, L) of row h are output row 2h, lanes [L, 2L) are row 2h+1, both already in
    # (Wo, C_out) order -> NHWC is a FREE reshape (no transpose / interleave HBM pass).
    return out_rows.reshape(N, Ho, Wo, C_out)


def decoder_block_forward(x_nchw, params, *, batch_block=None):
    """NCHW wrapper matching the PyTorch module: (N, C_in, H, W) -> (N, C_out, 2H, 2W)."""
    x_nhwc = jnp.transpose(x_nchw, (0, 2, 3, 1))
    y_nhwc = decoder_block_forward_nhwc(x_nhwc, params, batch_block=batch_block)
    return jnp.transpose(y_nhwc, (0, 3, 1, 2))


def _reference_forward(x_nchw, params):
    """Independent pure-JAX (lax.conv) reference with PyTorch semantics."""
    w1_t, b1, w2_t, b2 = params["w1"], params["b1"], params["w2"], params["b2"]
    N, C_in, H, W = x_nchw.shape
    Ho, Wo = 2 * H, 2 * W
    x = jnp.transpose(x_nchw, (0, 2, 3, 1))
    # ConvTranspose2d(k3,s2,p1,op1) == stride-1 conv over the zero-dilated, asym-padded
    # input with the spatially flipped, channel-swapped weight.
    xpad = jnp.zeros((N, Ho + 2, Wo + 2, C_in), x.dtype)
    xpad = xpad.at[:, 1:Ho:2, 1:Wo:2, :].set(x)
    w1 = jnp.transpose(jnp.flip(w1_t, axis=(2, 3)), (2, 3, 0, 1))       # HWIO
    h = lax.conv_general_dilated(xpad, w1, (1, 1), "VALID",
                                 dimension_numbers=("NHWC", "HWIO", "NHWC"),
                                 precision=lax.Precision.HIGHEST) + b1
    h = jnp.maximum(h, 0.0)
    w2 = jnp.transpose(w2_t, (2, 3, 1, 0))                              # HWIO
    z = lax.conv_general_dilated(h, w2, (1, 1), [(1, 1), (1, 1)],
                                 dimension_numbers=("NHWC", "HWIO", "NHWC"),
                                 precision=lax.Precision.HIGHEST) + b2
    mean = jnp.mean(z, axis=(1, 2), keepdims=True)
    var = jnp.mean(jnp.square(z - mean), axis=(1, 2), keepdims=True)
    y = (z - mean) * lax.rsqrt(var + 1e-5)
    return jnp.transpose(y, (0, 3, 1, 2))


def init_params(key, channels_in, channels_out):
    """Deterministic synthetic parameters matching the nn.Module shapes."""
    k1, k2, k3, k4 = jax.random.split(key, 4)
    fan1 = channels_in * 3 * 3
    fan2 = channels_in * 3 * 3
    s1 = 1.0 / jnp.sqrt(jnp.float32(fan1))
    s2 = 1.0 / jnp.sqrt(jnp.float32(fan2))
    return {
        # ConvTranspose2d weight: (in_channels, out_channels, kH, kW)
        "w1": jax.random.uniform(k1, (channels_in, channels_in, 3, 3),
                                 jnp.float32, -1.0, 1.0) * s1,
        "b1": jax.random.uniform(k2, (channels_in,), jnp.float32, -1.0, 1.0) * s1,
        # Conv2d weight: (out_channels, in_channels, kH, kW)
        "w2": jax.random.uniform(k3, (channels_out, channels_in, 3, 3),
                                 jnp.float32, -1.0, 1.0) * s2,
        "b2": jax.random.uniform(k4, (channels_out,), jnp.float32, -1.0, 1.0) * s2,
    }


if __name__ == "__main__":
    # Small shapes, but a batch large enough to exercise the batched grid steps
    # (batch_block = 4, grid = (2,) so both v7x TensorCores would be used).
    N, C_in, C_out, H, W = 8, 8, 4, 16, 16

    key = jax.random.PRNGKey(0)
    kp, kx = jax.random.split(key)
    params = init_params(kp, C_in, C_out)
    x = jax.random.normal(kx, (N, C_in, H, W), jnp.float32)

    fwd = jax.jit(decoder_block_forward)
    out = jax.block_until_ready(fwd(x, params))

    assert out.shape == (N, C_out, 2 * H, 2 * W), out.shape
    assert out.dtype == jnp.float32
    assert bool(jnp.all(jnp.isfinite(out)))

    # Numerical check vs an independent lax.conv reference. Tolerance absorbs the bf16 MXU
    # operands / accumulation-order differences while still catching any indexing/banding
    # bug (those produce O(1) errors after the instance norm).
    ref = jax.block_until_ready(_reference_forward(x, params))
    max_err = float(jnp.max(jnp.abs(out - ref)))
    assert max_err < 1e-1, f"max abs error vs reference = {max_err}"

    print("KERNEL_OK")
</pallas_src>

<mosaic_0001>
module attributes {stable_mosaic.version = 11 : i64} {
  func.func @_decoder_block_kernel(%arg0: i32, %arg1: memref<4x16x128xf32, #tpu.memory_space<vmem>>, %arg2: memref<256x512xbf16, #tpu.memory_space<vmem>>, %arg3: memref<1x512xf32, #tpu.memory_space<vmem>>, %arg4: memref<1024x256xbf16, #tpu.memory_space<vmem>>, %arg5: memref<256x256xf32, #tpu.memory_space<vmem>>, %arg6: memref<4x16x256xf32, #tpu.memory_space<vmem>>) attributes {dimension_semantics = [#tpu.dimension_semantics<parallel>], iteration_bounds = array<i64: 2>, scalar_prefetch = 0 : i64, scratch_operands = 0 : i64, tpu.core_type = #tpu.core_type<tc>, window_params = [{transform_indices = @transform_0, window_bounds = array<i64: 4, 16, 128>}, {pipeline_mode = #tpu.pipeline_mode<synchronous>, transform_indices = @transform_1, window_bounds = array<i64: 256, 512>}, {pipeline_mode = #tpu.pipeline_mode<synchronous>, transform_indices = @transform_2, window_bounds = array<i64: 1, 512>}, {pipeline_mode = #tpu.pipeline_mode<synchronous>, transform_indices = @transform_3, window_bounds = array<i64: 1024, 256>}, {pipeline_mode = #tpu.pipeline_mode<synchronous>, transform_indices = @transform_4, window_bounds = array<i64: 256, 256>}, {transform_indices = @transform_5, window_bounds = array<i64: 4, 16, 256>}]} {
    %c0 = arith.constant 0 : index
    %c0_0 = arith.constant 0 : index
    %c0_1 = arith.constant 0 : index
    %0 = vector.load %arg1[%c0, %c0_0, %c0_1] : memref<4x16x128xf32, #tpu.memory_space<vmem>>, vector<4x16x128xf32>
    %1 = vector.shape_cast %0 : vector<4x16x128xf32> to vector<64x128xf32>
    %2 = tpu.iota {dimensions = array<i32: 0>} : vector<64x1xi32>
    %c16_i32 = arith.constant 16 : i32
    %c0_i32 = arith.constant 0 : i32
    %3 = arith.cmpi eq, %c16_i32, %c0_i32 : i32
    %c1_i32 = arith.constant 1 : i32
    %4 = arith.select %3, %c1_i32, %c16_i32 : i32
    %5 = vector.broadcast %4 : i32 to vector<64x1xi32>
    %6 = arith.remsi %2, %5 : vector<64x1xi32>
    %c0_i32_2 = arith.constant 0 : i32
    %7 = vector.broadcast %c0_i32_2 : i32 to vector<64x1xi32>
    %8 = arith.cmpi ne, %6, %7 : vector<64x1xi32>
    %c0_i32_3 = arith.constant 0 : i32
    %9 = vector.broadcast %c0_i32_3 : i32 to vector<64x1xi32>
    %10 = arith.cmpi slt, %6, %9 : vector<64x1xi32>
    %c0_i32_4 = arith.constant 0 : i32
    %11 = arith.cmpi slt, %4, %c0_i32_4 : i32
    %12 = vector.broadcast %11 : i1 to vector<64x1xi1>
    %13 = vector.broadcast %12 : vector<64x1xi1> to vector<64x1xi1>
    %14 = arith.xori %10, %13 : vector<64x1xi1>
    %15 = arith.andi %14, %8 : vector<64x1xi1>
    %16 = vector.broadcast %4 : i32 to vector<64x1xi32>
    %17 = arith.addi %6, %16 : vector<64x1xi32>
    %18 = arith.select %15, %17, %6 : vector<64x1xi1>, vector<64x1xi32>
    %c15_i32 = arith.constant 15 : i32
    %19 = vector.broadcast %c15_i32 : i32 to vector<64x1xi32>
    %20 = arith.cmpi eq, %18, %19 : vector<64x1xi32>
    %c16_i32_5 = arith.constant 16 : i32
    %c0_i32_6 = arith.constant 0 : i32
    %21 = arith.cmpi eq, %c16_i32_5, %c0_i32_6 : i32
    %c1_i32_7 = arith.constant 1 : i32
    %22 = arith.select %21, %c1_i32_7, %c16_i32_5 : i32
    %23 = vector.broadcast %22 : i32 to vector<64x1xi32>
    %24 = arith.remsi %2, %23 : vector<64x1xi32>
    %c0_i32_8 = arith.constant 0 : i32
    %25 = vector.broadcast %c0_i32_8 : i32 to vector<64x1xi32>
    %26 = arith.cmpi ne, %24, %25 : vector<64x1xi32>
    %c0_i32_9 = arith.constant 0 : i32
    %27 = vector.broadcast %c0_i32_9 : i32 to vector<64x1xi32>
    %28 = arith.cmpi slt, %24, %27 : vector<64x1xi32>
    %c0_i32_10 = arith.constant 0 : i32
    %29 = arith.cmpi slt, %22, %c0_i32_10 : i32
    %30 = vector.broadcast %29 : i1 to vector<64x1xi1>
    %31 = vector.broadcast %30 : vector<64x1xi1> to vector<64x1xi1>
    %32 = arith.xori %28, %31 : vector<64x1xi1>
    %33 = arith.andi %32, %26 : vector<64x1xi1>
    %34 = vector.broadcast %22 : i32 to vector<64x1xi32>
    %35 = arith.addi %24, %34 : vector<64x1xi32>
    %36 = arith.select %33, %35, %24 : vector<64x1xi1>, vector<64x1xi32>
    %c0_i32_11 = arith.constant 0 : i32
    %37 = vector.broadcast %c0_i32_11 : i32 to vector<64x1xi32>
    %38 = arith.cmpi eq, %36, %37 : vector<64x1xi32>
    %cst = arith.constant 0.000000e+00 : f32
    %39 = vector.broadcast %cst : f32 to vector<1x128xf32>
    %40 = vector.extract_strided_slice %1 {offsets = [1, 0], sizes = [63, 128], strides = [1, 1]} : vector<64x128xf32> to vector<63x128xf32>
    %41 = tpu.concatenate %40, %39 in 0 : vector<63x128xf32>, vector<1x128xf32> -> vector<64x128xf32>
    %cst_12 = arith.constant 0.000000e+00 : f32
    %42 = vector.shape_cast %20 : vector<64x1xi1> to vector<64x1xi1>
    %43 = vector.broadcast %42 : vector<64x1xi1> to vector<64x128xi1>
    %44 = vector.broadcast %cst_12 : f32 to vector<64x128xf32>
    %45 = arith.select %43, %44, %41 : vector<64x128xi1>, vector<64x128xf32>
    %46 = tpu.concatenate %1, %45 in 1 : vector<64x128xf32>, vector<64x128xf32> -> vector<64x256xf32>
    %47 = arith.truncf %46 : vector<64x256xf32> to vector<64x256xbf16>
    %c0_13 = arith.constant 0 : index
    %c0_14 = arith.constant 0 : index
    %48 = vector.load %arg2[%c0_13, %c0_14] : memref<256x512xbf16, #tpu.memory_space<vmem>>, vector<256x512xbf16>
    %cst_15 = arith.constant dense<0.000000e+00> : vector<64x512xf32>
    %49 = tpu.matmul %47, %48, %cst_15 {dimension_numbers = #tpu.dot_dimension_numbers<[1], [0], [0], [1], [0, 0, 1, 1], [], []>} : vector<64x256xbf16>, vector<256x512xbf16>, vector<64x512xf32> -> vector<64x512xf32>
    %c0_16 = arith.constant 0 : index
    %c0_17 = arith.constant 0 : index
    %50 = vector.load %arg3[%c0_16, %c0_17] : memref<1x512xf32, #tpu.memory_space<vmem>>, vector<1x512xf32>
    %51 = vector.broadcast %50 : vector<1x512xf32> to vector<64x512xf32>
    %52 = arith.addf %49, %51 : vector<64x512xf32>
    %cst_18 = arith.constant 0.000000e+00 : f32
    %53 = vector.broadcast %cst_18 : f32 to vector<64x512xf32>
    %54 = arith.maximumf %52, %53 : vector<64x512xf32>
    %55 = vector.extract_strided_slice %54 {offsets = [0, 0], sizes = [64, 256], strides = [1, 1]} : vector<64x512xf32> to vector<64x256xf32>
    %56 = vector.extract_strided_slice %54 {offsets = [0, 256], sizes = [64, 256], strides = [1, 1]} : vector<64x512xf32> to vector<64x256xf32>
    %cst_19 = arith.constant 0.000000e+00 : f32
    %57 = vector.broadcast %cst_19 : f32 to vector<1x256xf32>
    %58 = vector.extract_strided_slice %56 {offsets = [0, 0], sizes = [63, 256], strides = [1, 1]} : vector<64x256xf32> to vector<63x256xf32>
    %59 = tpu.concatenate %57, %58 in 0 : vector<1x256xf32>, vector<63x256xf32> -> vector<64x256xf32>
    %cst_20 = arith.constant 0.000000e+00 : f32
    %60 = vector.shape_cast %38 : vector<64x1xi1> to vector<64x1xi1>
    %61 = vector.broadcast %60 : vector<64x1xi1> to vector<64x256xi1>
    %62 = vector.broadcast %cst_20 : f32 to vector<64x256xf32>
    %63 = arith.select %61, %62, %59 : vector<64x256xi1>, vector<64x256xf32>
    %64 = vector.extract_strided_slice %55 {offsets = [1, 0], sizes = [63, 256], strides = [1, 1]} : vector<64x256xf32> to vector<63x256xf32>
    %65 = tpu.concatenate %64, %57 in 0 : vector<63x256xf32>, vector<1x256xf32> -> vector<64x256xf32>
    %cst_21 = arith.constant 0.000000e+00 : f32
    %66 = vector.shape_cast %20 : vector<64x1xi1> to vector<64x1xi1>
    %67 = vector.broadcast %66 : vector<64x1xi1> to vector<64x256xi1>
    %68 = vector.broadcast %cst_21 : f32 to vector<64x256xf32>
    %69 = arith.select %67, %68, %65 : vector<64x256xi1>, vector<64x256xf32>
    %70 = tpu.concatenate %63, %54, %69 in 1 : vector<64x256xf32>, vector<64x512xf32>, vector<64x256xf32> -> vector<64x1024xf32>
    %71 = arith.truncf %70 : vector<64x1024xf32> to vector<64x1024xbf16>
    %c0_22 = arith.constant 0 : index
    %c0_23 = arith.constant 0 : index
    %72 = vector.load %arg4[%c0_22, %c0_23] : memref<1024x256xbf16, #tpu.memory_space<vmem>>, vector<1024x256xbf16>
    %cst_24 = arith.constant dense<0.000000e+00> : vector<64x256xf32>
    %73 = tpu.matmul %71, %72, %cst_24 {dimension_numbers = #tpu.dot_dimension_numbers<[1], [0], [0], [1], [0, 0, 1, 1], [], []>} : vector<64x1024xbf16>, vector<1024x256xbf16>, vector<64x256xf32> -> vector<64x256xf32>
    %74 = vector.shape_cast %73 : vector<64x256xf32> to vector<4x16x256xf32>
    %cst_25 = arith.constant dense<0.000000e+00> : vector<4x256xf32>
    %75 = vector.multi_reduction <add>, %74, %cst_25 [1] : vector<4x16x256xf32> to vector<4x256xf32>
    %76 = arith.mulf %74, %74 : vector<4x16x256xf32>
    %cst_26 = arith.constant dense<0.000000e+00> : vector<4x256xf32>
    %77 = vector.multi_reduction <add>, %76, %cst_26 [1] : vector<4x16x256xf32> to vector<4x256xf32>
    %c0_27 = arith.constant 0 : index
    %c0_28 = arith.constant 0 : index
    %78 = vector.load %arg5[%c0_27, %c0_28] : memref<256x256xf32, #tpu.memory_space<vmem>>, vector<256x256xf32>
    %cst_29 = arith.constant dense<0.000000e+00> : vector<4x256xf32>
    %79 = tpu.matmul %75, %78, %cst_29 {dimension_numbers = #tpu.dot_dimension_numbers<[1], [0], [0], [1], [0, 0, 1, 1], [], []>} : vector<4x256xf32>, vector<256x256xf32>, vector<4x256xf32> -> vector<4x256xf32>
    %c0_30 = arith.constant 0 : index
    %c0_31 = arith.constant 0 : index
    %80 = vector.load %arg5[%c0_30, %c0_31] : memref<256x256xf32, #tpu.memory_space<vmem>>, vector<256x256xf32>
    %cst_32 = arith.constant dense<0.000000e+00> : vector<4x256xf32>
    %81 = tpu.matmul %77, %80, %cst_32 {dimension_numbers = #tpu.dot_dimension_numbers<[1], [0], [0], [1], [0, 0, 1, 1], [], []>} : vector<4x256xf32>, vector<256x256xf32>, vector<4x256xf32> -> vector<4x256xf32>
    %82 = arith.mulf %79, %79 : vector<4x256xf32>
    %83 = arith.subf %81, %82 : vector<4x256xf32>
    %cst_33 = arith.constant 9.99999974E-6 : f32
    %84 = vector.broadcast %cst_33 : f32 to vector<4x256xf32>
    %85 = arith.addf %83, %84 : vector<4x256xf32>
    %86 = math.rsqrt %85 : vector<4x256xf32>
    %87 = vector.shape_cast %79 : vector<4x256xf32> to vector<4x1x256xf32>
    %88 = vector.broadcast %87 : vector<4x1x256xf32> to vector<4x16x256xf32>
    %89 = arith.subf %74, %88 : vector<4x16x256xf32>
    %90 = vector.shape_cast %86 : vector<4x256xf32> to vector<4x1x256xf32>
    %91 = vector.broadcast %90 : vector<4x1x256xf32> to vector<4x16x256xf32>
    %92 = arith.mulf %89, %91 : vector<4x16x256xf32>
    %c0_34 = arith.constant 0 : index
    %c0_35 = arith.constant 0 : index
    %c0_36 = arith.constant 0 : index
    %93 = vector.load %arg6[%c0_34, %c0_35, %c0_36] : memref<4x16x256xf32, #tpu.memory_space<vmem>>, vector<4x16x256xf32>
    tpu.vector_store %arg6[%c0_34, %c0_35, %c0_36], %92 {strides = array<i32>} : memref<4x16x256xf32, #tpu.memory_space<vmem>>, vector<4x16x256xf32>,
    return
  }
  func.func @transform_0(%arg0: i32) -> (i32, i32, i32) {
    %c0_i32 = arith.constant 0 : i32
    %c0_i32_0 = arith.constant 0 : i32
    %c0_i32_1 = arith.constant 0 : i32
    return %arg0, %c0_i32, %c0_i32_0 : i32, i32, i32
  }
  func.func @transform_1(%arg0: i32) -> (i32, i32) {
    %c0_i32 = arith.constant 0 : i32
    %c0_i32_0 = arith.constant 0 : i32
    %c0_i32_1 = arith.constant 0 : i32
    return %c0_i32, %c0_i32_0 : i32, i32
  }
  func.func @transform_2(%arg0: i32) -> (i32, i32) {
    %c0_i32 = arith.constant 0 : i32
    %c0_i32_0 = arith.constant 0 : i32
    %c0_i32_1 = arith.constant 0 : i32
    return %c0_i32, %c0_i32_0 : i32, i32
  }
  func.func @transform_3(%arg0: i32) -> (i32, i32) {
    %c0_i32 = arith.constant 0 : i32
    %c0_i32_0 = arith.constant 0 : i32
    %c0_i32_1 = arith.constant 0 : i32
    return %c0_i32, %c0_i32_0 : i32, i32
  }
  func.func @transform_4(%arg0: i32) -> (i32, i32) {
    %c0_i32 = arith.constant 0 : i32
    %c0_i32_0 = arith.constant 0 : i32
    %c0_i32_1 = arith.constant 0 : i32
    return %c0_i32, %c0_i32_0 : i32, i32
  }
  func.func @transform_5(%arg0: i32) -> (i32, i32, i32) {
    %c0_i32 = arith.constant 0 : i32
    %c0_i32_0 = arith.constant 0 : i32
    %c0_i32_1 = arith.constant 0 : i32
    return %arg0, %c0_i32, %c0_i32_0 : i32, i32, i32
  }
}

</mosaic_0001>

<llo_original>
// kernel: tile.8
$region0: #{tile.8}
  #allocation0 [shape = 's32[1]{0}', space=sflag, size = 0x4, scoped, tag = 'scoped memory for tile.8']
  %s0 = inlined_call_operand.vmem [shape: f32[8], index: 0, kind: input, shape index: {}]
  %s1 = inlined_call_operand.vmem [shape: f32[64,8], index: 1, kind: output, shape index: {}]
  // Predicated region
  $region2: #{tile.8} parent=0 // pred_check
    _
  $region3: #{tile.8} parent=0 // pred_check_branch
    %3 = sbr.rel (0) target = $region5
  $region4: #{tile.8} parent=0 // pred_region
    _
  $region5: #{tile.8} parent=0 // pred_fallthru
    _
  %v4 = vld [vmem:[%s0] ss:$0 sm:$0xff]
  %5 = vst [vmem:[%s1] sm:$0xff] %v4
  %s6 = scalar_lea.vmem %s1, 8
  %7 = vst [vmem:[%s6] sm:$0xff] %v4
  %s8 = scalar_lea.vmem %s1, 16
  %9 = vst [vmem:[%s8] sm:$0xff] %v4
  %s10 = scalar_lea.vmem %s1, 24
  %11 = vst [vmem:[%s10] sm:$0xff] %v4
  %s12 = scalar_lea.vmem %s1, 32
  %13 = vst [vmem:[%s12] sm:$0xff] %v4
  %s14 = scalar_lea.vmem %s1, 40
  %15 = vst [vmem:[%s14] sm:$0xff] %v4
  %s16 = scalar_lea.vmem %s1, 48
  %17 = vst [vmem:[%s16] sm:$0xff] %v4
  %s18 = scalar_lea.vmem %s1, 56
  %19 = vst [vmem:[%s18] sm:$0xff] %v4

// kernel: tile.9
$region0: #{tile.9}
  %s0 = inlined_call_operand.vmem [shape: f32[64,8], index: 0, kind: input, shape index: {}]
  %s1 = inlined_call_operand.vmem [shape: f32[1,512], index: 1, kind: output, shape index: {}]
  $region1: #{tile.9} parent=0
    #allocation0 [shape = 'u8[16384]{0}', space=vmem, size = 0x4000, scoped, tag = 'scoped mem for output reshape']
    %s2 = smov 3
    %v3 = vld [vmem:[%s0] ss:$16 sm:%s2]
    %s4 = smov 12
    %v5 = vld [vmem:[%s0] ss:$16 sm:%s4]
    %vm6 = vcmask 1043458
    %v7 = vsel %vm6, %v5, %v3
    %vm8 = vcmask 64512
    %9 = vst.msk [vmem:[#allocation0] ss:$8 sm:$0xf] %vm8, %v7
    %s10 = scalar_lea.vmem %s0, 15
    %s11 = smov 3
    %v12 = vld [vmem:[%s10] ss:$16 sm:%s11]
    %s13 = scalar_lea.vmem %s0, 15
    %s14 = smov 12
    %v15 = vld [vmem:[%s13] ss:$16 sm:%s14]
    %vm16 = vcmask 1043458
    %v17 = vsel %vm16, %v15, %v12
    %18 = vrot.lane.b32.xlu0 %v17, 120
    %v19 = vpop.permute.xlu0 %18
    %vm20 = vcmask 1048512
    %21 = vst.msk [vmem:[#allocation0] ss:$8 sm:$0xf] %vm20, %v19
    %s22 = scalar_lea.vmem %s0, 14
    %s23 = smov 3
    %v24 = vld [vmem:[%s22] ss:$16 sm:%s23]
    %s25 = scalar_lea.vmem %s0, 14
    %s26 = smov 12
    %v27 = vld [vmem:[%s25] ss:$16 sm:%s26]
    %vm28 = vcmask 1043458
    %v29 = vsel %vm28, %v27, %v24
    %30 = vrot.lane.b32.xlu0 %v29, 112
    %v31 = vpop.permute.xlu0 %30
    %vm32 = vcmask 982912
    %33 = vst.msk [vmem:[#allocation0] ss:$8 sm:$0xf] %vm32, %v31
    %s34 = scalar_lea.vmem %s0, 13
    %s35 = smov 3
    %v36 = vld [vmem:[%s34] ss:$16 sm:%s35]
    %s37 = scalar_lea.vmem %s0, 13
    %s38 = smov 12
    %v39 = vld [vmem:[%s37] ss:$16 sm:%s38]
    %vm40 = vcmask 1043458
    %v41 = vsel %vm40, %v39, %v36
    %42 = vrot.lane.b32.xlu0 %v41, 104
    %v43 = vpop.permute.xlu0 %42
    %vm44 = vcmask 917312
    %45 = vst.msk [vmem:[#allocation0] ss:$8 sm:$0xf] %vm44, %v43
    %s46 = scalar_lea.vmem %s0, 12
    %s47 = smov 3
    %v48 = vld [vmem:[%s46] ss:$16 sm:%s47]
    %s49 = scalar_lea.vmem %s0, 12
    %s50 = smov 12
    %v51 = vld [vmem:[%s49] ss:$16 sm:%s50]
    %vm52 = vcmask 1043458
    %v53 = vsel %vm52, %v51, %v48
    %54 = vrot.lane.b32.xlu0 %v53, 96
    %v55 = vpop.permute.xlu0 %54
    %vm56 = vcmask 851712
    %57 = vst.msk [vmem:[#allocation0] ss:$8 sm:$0xf] %vm56, %v55
    %s58 = scalar_lea.vmem %s0, 11
    %s59 = smov 3
    %v60 = vld [vmem:[%s58] ss:$16 sm:%s59]
    %s61 = scalar_lea.vmem %s0, 11
    %s62 = smov 12
    %v63 = vld [vmem:[%s61] ss:$16 sm:%s62]
    %vm64 = vcmask 1043458
    %v65 = vsel %vm64, %v63, %v60
    %66 = vrot.lane.b32.xlu0 %v65, 88
    %v67 = vpop.permute.xlu0 %66
    %vm68 = vcmask 786112
    %69 = vst.msk [vmem:[#allocation0] ss:$8 sm:$0xf] %vm68, %v67
    %s70 = scalar_lea.vmem %s0, 10
    %s71 = smov 3
    %v72 = vld [vmem:[%s70] ss:$16 sm:%s71]
    %s73 = scalar_lea.vmem %s0, 10
    %s74 = smov 12
    %v75 = vld [vmem:[%s73] ss:$16 sm:%s74]
    %vm76 = vcmask 1043458
    %v77 = vsel %vm76, %v75, %v72
    %78 = vrot.lane.b32.xlu0 %v77, 80
    %v79 = vpop.permute.xlu0 %78
    %vm80 = vcmask 720512
    %81 = vst.msk [vmem:[#allocation0] ss:$8 sm:$0xf] %vm80, %v79
    %s82 = scalar_lea.vmem %s0, 9
    %s83 = smov 3
    %v84 = vld [vmem:[%s82] ss:$16 sm:%s83]
    %s85 = scalar_lea.vmem %s0, 9
    %s86 = smov 12
    %v87 = vld [vmem:[%s85] ss:$16 sm:%s86]
    %vm88 = vcmask 1043458
    %v89 = vsel %vm88, %v87, %v84
    %90 = vrot.lane.b32.xlu0 %v89, 72
    %v91 = vpop.permute.xlu0 %90
    %vm92 = vcmask 654912
    %93 = vst.msk [vmem:[#allocation0] ss:$8 sm:$0xf] %vm92, %v91
    %s94 = scalar_lea.vmem %s0, 8
    %s95 = smov 3
    %v96 = vld [vmem:[%s94] ss:$16 sm:%s95]
    %s97 = scalar_lea.vmem %s0, 8
    %s98 = smov 12
    %v99 = vld [vmem:[%s97] ss:$16 sm:%s98]
    %vm100 = vcmask 1043458
    %v101 = vsel %vm100, %v99, %v96
    %102 = vrot.lane.b32.xlu0 %v101, 64
    %v103 = vpop.permute.xlu0 %102
    %vm104 = vcmask 589312
    %105 = vst.msk [vmem:[#allocation0] ss:$8 sm:$0xf] %vm104, %v103
    %s106 = scalar_lea.vmem %s0, 7
    %s107 = smov 3
    %v108 = vld [vmem:[%s106] ss:$16 sm:%s107]
    %s109 = scalar_lea.vmem %s0, 7
    %s110 = smov 12
    %v111 = vld [vmem:[%s109] ss:$16 sm:%s110]
    %vm112 = vcmask 1043458
    %v113 = vsel %vm112, %v111, %v108
    %114 = vrot.lane.b32.xlu0 %v113, 56
    %v115 = vpop.permute.xlu0 %114
    %vm116 = vcmask 523712
    %117 = vst.msk [vmem:[#allocation0] ss:$8 sm:$0xf] %vm116, %v115
    %s118 = scalar_lea.vmem %s0, 6
    %s119 = smov 3
    %v120 = vld [vmem:[%s118] ss:$16 sm:%s119]
    %s121 = scalar_lea.vmem %s0, 6
    %s122 = smov 12
    %v123 = vld [vmem:[%s121] ss:$16 sm:%s122]
    %vm124 = vcmask 1043458
    %v125 = vsel %vm124, %v123, %v120
    %126 = vrot.lane.b32.xlu0 %v125, 48
    %v127 = vpop.permute.xlu0 %126
    %vm128 = vcmask 458112
    %129 = vst.msk [vmem:[#allocation0] ss:$8 sm:$0xf] %vm128, %v127
    %s130 = scalar_lea.vmem %s0, 5
    %s131 = smov 3
    %v132 = vld [vmem:[%s130] ss:$16 sm:%s131]
    %s133 = scalar_lea.vmem %s0, 5
    %s134 = smov 12
    %v135 = vld [vmem:[%s133] ss:$16 sm:%s134]
    %vm136 = vcmask 1043458
    %v137 = vsel %vm136, %v135, %v132
    %138 = vrot.lane.b32.xlu0 %v137, 40
    %v139 = vpop.permute.xlu0 %138
    %vm140 = vcmask 392512
    %141 = vst.msk [vmem:[#allocation0] ss:$8 sm:$0xf] %vm140, %v139
    %s142 = scalar_lea.vmem %s0, 4
    %s143 = smov 3
    %v144 = vld [vmem:[%s142] ss:$16 sm:%s143]
    %s145 = scalar_lea.vmem %s0, 4
    %s146 = smov 12
    %v147 = vld [vmem:[%s145] ss:$16 sm:%s146]
    %vm148 = vcmask 1043458
    %v149 = vsel %vm148, %v147, %v144
    %150 = vrot.lane.b32.xlu0 %v149, 32
    %v151 = vpop.permute.xlu0 %150
    %vm152 = vcmask 326912
    %153 = vst.msk [vmem:[#allocation0] ss:$8 sm:$0xf] %vm152, %v151
    %s154 = scalar_lea.vmem %s0, 3
    %s155 = smov 3
    %v156 = vld [vmem:[%s154] ss:$16 sm:%s155]
    %s157 = scalar_lea.vmem %s0, 3
    %s158 = smov 12
    %v159 = vld [vmem:[%s157] ss:$16 sm:%s158]
    %vm160 = vcmask 1043458
    %v161 = vsel %vm160, %v159, %v156
    %162 = vrot.lane.b32.xlu0 %v161, 24
    %v163 = vpop.permute.xlu0 %162
    %vm164 = vcmask 261312
    %165 = vst.msk [vmem:[#allocation0] ss:$8 sm:$0xf] %vm164, %v163
    %s166 = scalar_lea.vmem %s0, 2
    %s167 = smov 3
    %v168 = vld [vmem:[%s166] ss:$16 sm:%s167]
    %s169 = scalar_lea.vmem %s0, 2
    %s170 = smov 12
    %v171 = vld [vmem:[%s169] ss:$16 sm:%s170]
    %vm172 = vcmask 1043458
    %v173 = vsel %vm172, %v171, %v168
    %174 = vrot.lane.b32.xlu0 %v173, 16
    %v175 = vpop.permute.xlu0 %174
    %vm176 = vcmask 195712
    %177 = vst.msk [vmem:[#allocation0] ss:$8 sm:$0xf] %vm176, %v175
    %s178 = scalar_lea.vmem %s0, 1
    %s179 = smov 3
    %v180 = vld [vmem:[%s178] ss:$16 sm:%s179]
    %s181 = scalar_lea.vmem %s0, 1
    %s182 = smov 12
    %v183 = vld [vmem:[%s181] ss:$16 sm:%s182]
    %vm184 = vcmask 1043458
    %v185 = vsel %vm184, %v183, %v180
    %186 = vrot.lane.b32.xlu0 %v185, 8
    %v187 = vpop.permute.xlu0 %186
    %vm188 = vcmask 130112
    %189 = vst.msk [vmem:[#allocation0] ss:$8 sm:$0xf] %vm188, %v187
    %s191 = sshllo.u32 0, 1
    %v193 = vld [vmem:[#allocation0] sm:%s191]
    %s194 = sshllo.u32 0, 1
    %195 = vst [vmem:[%s1] sm:%s194] %v193
    %s196 = scalar_lea.vmem [#allocation0], 8
    %v197 = vld [vmem:[%s196] sm:%s191]
    %s198 = sshllo.u32 0, 1
    %s199 = scalar_lea.vmem %s1, 1
    %200 = vst [vmem:[%s199] sm:%s198] %v197
    %s201 = scalar_lea.vmem [#allocation0], 16
    %v202 = vld [vmem:[%s201] sm:%s191]
    %s203 = sshllo.u32 0, 1
    %s204 = smul.addr 1, 2
    %s205 = scalar_lea.vmem %s1, %s204
    %206 = vst [vmem:[%s205] sm:%s203] %v202
    %s207 = scalar_lea.vmem [#allocation0], 24
    %v208 = vld [vmem:[%s207] sm:%s191]
    %s209 = sshllo.u32 0, 1
    %s210 = smul.addr 1, 3
    %s211 = scalar_lea.vmem %s1, %s210
    %212 = vst [vmem:[%s211] sm:%s209] %v208

// kernel: decoder_block_forward.1
$region0: #{decoder_block_forward.1}
  #allocation0 [shape = 'u32[]', space=smem, size = 0x4, offset = 0x4, fixed_abs, tag = 'smem constant byte address 0x4 - core index']
  #allocation1 [shape = 'u32[144,128]{1,0:T(1,128)}', space=vmem, size = 0x12000, scoped, tag = 'internal scratch']
  %s0 = inlined_call_operand.vmem [shape: f32[8,16,128], index: 0, kind: input, shape index: {}]
  %s1 = inlined_call_operand.vmem [shape: bf16[256,512], index: 1, kind: input, shape index: {}]
  %s2 = inlined_call_operand.vmem [shape: f32[1,512], index: 2, kind: input, shape index: {}]
  %s3 = inlined_call_operand.vmem [shape: bf16[1024,256], index: 3, kind: input, shape index: {}]
  %s4 = inlined_call_operand.vmem [shape: f32[256,256], index: 4, kind: input, shape index: {}]
  %s5 = inlined_call_operand.vmem [shape: f32[8,16,256], index: 5, kind: output, shape index: {}]
  %s6 = sld [smem:[#allocation0]]
  $region53: #{decoder_block_forward.1} parent=0
    _
  %s8 = ssub.s32 1, %s6
  %s9 = scalar_select 0, %s8, %s6
  loop: start=0, step=1, limit=4
  $region2: #{decoder_block_forward.1} parent=0 // loop_pre_header
    _
  $region3: #{decoder_block_forward.1} parent=0 // loop_header
    %s11 = sphi 0, %s15
    %p12 = scmp.ge.s32.totalorder %s11, 4
    %s21 = sphi 0, %s23
    %s24 = sphi 0, %s21
    %s25 = sphi 0, %s24
    %s41 = sphi 0, %s25
    %s45 = sphi 0, %s45
    %s47 = sphi 0, %s45
    %s48 = sphi 0, %s47
    %s62 = sphi 0, %s48
    %s66 = sphi 0, %s66
    %s68 = sphi 0, %s66
    %s69 = sphi 0, %s68
    %s83 = sphi 0, %s69
    %s87 = sphi 0, %s87
    %s89 = sphi 0, %s87
    %s90 = sphi 0, %s89
    %s104 = sphi 0, %s90
    %s108 = sphi 0, %s108
    %s110 = sphi 0, %s108
    %s111 = sphi 0, %s110
    %s125 = sphi 0, %s111
    %s131 = sphi 0, %s133
    %s134 = sphi 0, %s131
    %s135 = sphi 0, %s134
    %s151 = sphi 0, %s135
  $region4: #{decoder_block_forward.1} parent=0 // loop_header_branch
    %14 = sbr.rel (%p12) target = $region8
  $region5: #{decoder_block_forward.1} parent=0 // loop_body
    %s16 = ssub.s32 %s11, 1
    %s17 = ssub.s32 %s11, 2
    %s18 = sadd.s32 %s11, 1
    %s19 = ssub.s32 %s11, %s18
    %p20 = scmp.eq.s32.totalorder %s19, 0
    %s22 = sadd.s32 %s21, 1
    %s23 = scalar_select %p20, %s21, %s22
    %p26 = pneg %p20
    %p27 = scmp.eq.s32.totalorder %s11, 1
    %p28 = por %p26, %p27
    %p29 = scmp.ne.s32.totalorder %s21, %s24
    %p30 = scmp.eq.s32.totalorder %s11, 0
    %p31 = por %p29, %p30
    %p32 = scmp.ne.s32.totalorder %s21, %s24
    %p33 = scmp.eq.s32.totalorder %s16, 1
    %p34 = por %p32, %p33
    %p35 = scmp.ne.s32.totalorder %s24, %s25
    %p36 = scmp.eq.s32.totalorder %s16, 0
    %p37 = por %p35, %p36
    %p38 = scmp.ne.s32.totalorder %s24, %s25
    %p39 = scmp.eq.s32.totalorder %s17, 1
    %p40 = por %p38, %p39
    %p42 = scmp.ne.s32.totalorder %s25, %s41
    %p43 = scmp.eq.s32.totalorder %s17, 0
    %p44 = por %p42, %p43
    %s46 = sadd.s32 %s45, 1
    %p49 = scmp.eq.s32.totalorder %s11, 1
    %p50 = scmp.ne.s32.totalorder %s45, %s47
    %p51 = scmp.eq.s32.totalorder %s11, 0
    %p52 = por %p50, %p51
    %p53 = scmp.ne.s32.totalorder %s45, %s47
    %p54 = scmp.eq.s32.totalorder %s16, 1
    %p55 = por %p53, %p54
    %p56 = scmp.ne.s32.totalorder %s47, %s48
    %p57 = scmp.eq.s32.totalorder %s16, 0
    %p58 = por %p56, %p57
    %p59 = scmp.ne.s32.totalorder %s47, %s48
    %p60 = scmp.eq.s32.totalorder %s17, 1
    %p61 = por %p59, %p60
    %p63 = scmp.ne.s32.totalorder %s48, %s62
    %p64 = scmp.eq.s32.totalorder %s17, 0
    %p65 = por %p63, %p64
    %s67 = sadd.s32 %s66, 1
    %p70 = scmp.eq.s32.totalorder %s11, 1
    %p71 = scmp.ne.s32.totalorder %s66, %s68
    %p72 = scmp.eq.s32.totalorder %s11, 0
    %p73 = por %p71, %p72
    %p74 = scmp.ne.s32.totalorder %s66, %s68
    %p75 = scmp.eq.s32.totalorder %s16, 1
    %p76 = por %p74, %p75
    %p77 = scmp.ne.s32.totalorder %s68, %s69
    %p78 = scmp.eq.s32.totalorder %s16, 0
    %p79 = por %p77, %p78
    %p80 = scmp.ne.s32.totalorder %s68, %s69
    %p81 = scmp.eq.s32.totalorder %s17, 1
    %p82 = por %p80, %p81
    %p84 = scmp.ne.s32.totalorder %s69, %s83
    %p85 = scmp.eq.s32.totalorder %s17, 0
    %p86 = por %p84, %p85
    %s88 = sadd.s32 %s87, 1
    %p91 = scmp.eq.s32.totalorder %s11, 1
    %p92 = scmp.ne.s32.totalorder %s87, %s89
    %p93 = scmp.eq.s32.totalorder %s11, 0
    %p94 = por %p92, %p93
    %p95 = scmp.ne.s32.totalorder %s87, %s89
    %p96 = scmp.eq.s32.totalorder %s16, 1
    %p97 = por %p95, %p96
    %p98 = scmp.ne.s32.totalorder %s89, %s90
    %p99 = scmp.eq.s32.totalorder %s16, 0
    %p100 = por %p98, %p99
    %p101 = scmp.ne.s32.totalorder %s89, %s90
    %p102 = scmp.eq.s32.totalorder %s17, 1
    %p103 = por %p101, %p102
    %p105 = scmp.ne.s32.totalorder %s90, %s104
    %p106 = scmp.eq.s32.totalorder %s17, 0
    %p107 = por %p105, %p106
    %s109 = sadd.s32 %s108, 1
    %p112 = scmp.eq.s32.totalorder %s11, 1
    %p113 = scmp.ne.s32.totalorder %s108, %s110
    %p114 = scmp.eq.s32.totalorder %s11, 0
    %p115 = por %p113, %p114
    %p116 = scmp.ne.s32.totalorder %s108, %s110
    %p117 = scmp.eq.s32.totalorder %s16, 1
    %p118 = por %p116, %p117
    %p119 = scmp.ne.s32.totalorder %s110, %s111
    %p120 = scmp.eq.s32.totalorder %s16, 0
    %p121 = por %p119, %p120
    %p122 = scmp.ne.s32.totalorder %s110, %s111
    %p123 = scmp.eq.s32.totalorder %s17, 1
    %p124 = por %p122, %p123
    %p126 = scmp.ne.s32.totalorder %s111, %s125
    %p127 = scmp.eq.s32.totalorder %s17, 0
    %p128 = por %p126, %p127
    %s129 = ssub.s32 %s11, %s18
    %p130 = scmp.eq.s32.totalorder %s129, 0
    %s132 = sadd.s32 %s131, 1
    %s133 = scalar_select %p130, %s131, %s132
    %p136 = pneg %p130
    %p137 = scmp.eq.s32.totalorder %s11, 1
    %p138 = por %p136, %p137
    %p139 = scmp.ne.s32.totalorder %s131, %s134
    %p140 = scmp.eq.s32.totalorder %s11, 0
    %p141 = por %p139, %p140
    %p142 = scmp.ne.s32.totalorder %s131, %s134
    %p143 = scmp.eq.s32.totalorder %s16, 1
    %p144 = por %p142, %p143
    %p145 = scmp.ne.s32.totalorder %s134, %s135
    %p146 = scmp.eq.s32.totalorder %s16, 0
    %p147 = por %p145, %p146
    %p148 = scmp.ne.s32.totalorder %s134, %s135
    %p149 = scmp.eq.s32.totalorder %s17, 1
    %p150 = por %p148, %p149
    %p152 = scmp.ne.s32.totalorder %s135, %s151
    %p153 = scmp.eq.s32.totalorder %s17, 0
    %p154 = por %p152, %p153
    %p155 = scmp.le.s32.totalorder 1, %s11
    %p156 = scmp.lt.s32.totalorder %s11, 3
    %p157 = pnand %p155, %p156
    %p158 = pneg %p157
    // Predicated region
    $region9: #{decoder_block_forward.1} parent=5 // pred_check
      _
    $region10: #{decoder_block_forward.1} parent=5 // pred_check_branch
      %160 = sbr.rel (%p157) target = $region12
    $region11: #{decoder_block_forward.1} parent=5 // pred_region
      %s161 = ssub.s32 %s11, 1
      // Predicated region
      $region13: #{decoder_block_forward.1} parent=11 // pred_check
        %p162 = pneg %p58
      $region14: #{decoder_block_forward.1} parent=11 // pred_check_branch
        %164 = sbr.rel (%p162) target = $region16
      $region15: #{decoder_block_forward.1} parent=11 // pred_region
        _
      $region16: #{decoder_block_forward.1} parent=11 // pred_fallthru
        _
      // Predicated region
      $region17: #{decoder_block_forward.1} parent=11 // pred_check
        %p165 = pneg %p79
      $region18: #{decoder_block_forward.1} parent=11 // pred_check_branch
        %167 = sbr.rel (%p165) target = $region20
      $region19: #{decoder_block_forward.1} parent=11 // pred_region
        _
      $region20: #{decoder_block_forward.1} parent=11 // pred_fallthru
        _
      // Predicated region
      $region21: #{decoder_block_forward.1} parent=11 // pred_check
        %p168 = pneg %p100
      $region22: #{decoder_block_forward.1} parent=11 // pred_check_branch
        %170 = sbr.rel (%p168) target = $region24
      $region23: #{decoder_block_forward.1} parent=11 // pred_region
        _
      $region24: #{decoder_block_forward.1} parent=11 // pred_fallthru
        _
      // Predicated region
      $region25: #{decoder_block_forward.1} parent=11 // pred_check
        %p171 = pneg %p121
      $region26: #{decoder_block_forward.1} parent=11 // pred_check_branch
        %173 = sbr.rel (%p171) target = $region28
      $region27: #{decoder_block_forward.1} parent=11 // pred_region
        _
      $region28: #{decoder_block_forward.1} parent=11 // pred_fallthru
        _
    $region12: #{decoder_block_forward.1} parent=5 // pred_fallthru
      _
    %p174 = scmp.lt.s32.totalorder %s11, 2
    // Predicated region
    $region29: #{decoder_block_forward.1} parent=5 // pred_check
      %p175 = pneg %p174
    $region30: #{decoder_block_forward.1} parent=5 // pred_check_branch
      %177 = sbr.rel (%p175) target = $region32
    $region31: #{decoder_block_forward.1} parent=5 // pred_region
      // Predicated region
      $region33: #{decoder_block_forward.1} parent=31 // pred_check
        %p178 = pneg %p31
      $region34: #{decoder_block_forward.1} parent=31 // pred_check_branch
        %180 = sbr.rel (%p178) target = $region36
      $region35: #{decoder_block_forward.1} parent=31 // pred_region
        %s181 = smul.u32 4, %s11
        %p182 = scmp.lt.s32.totalorder %s181, 7
        %s183 = scalar_select %p182, %s181, 7
        %s184 = smul.addr %s183, 2
        %s185 = smul.addr %s184, 8
        %s186 = scalar_lea.vmem %s0, %s185
        %s187 = smul.u32 4, %s11
      $region36: #{decoder_block_forward.1} parent=31 // pred_fallthru
        _
    $region32: #{decoder_block_forward.1} parent=5 // pred_fallthru
      _
    %p188 = scmp.le.s32.totalorder 1, %s11
    %p189 = scmp.lt.s32.totalorder %s11, 3
    %p190 = pnand %p188, %p189
    %p191 = pneg %p190
    // Predicated region
    $region37: #{decoder_block_forward.1} parent=5 // pred_check
      _
    $region38: #{decoder_block_forward.1} parent=5 // pred_check_branch
      %193 = sbr.rel (%p190) target = $region40
    $region39: #{decoder_block_forward.1} parent=5 // pred_region
      %s194 = ssub.s32 %s11, 1
      %s195 = smul.u32 4, %s16
      %p196 = scmp.lt.s32.totalorder %s195, 7
      %s197 = scalar_select %p196, %s195, 7
      %s198 = smul.addr %s197, 2
      %s199 = smul.addr %s198, 8
      %s200 = scalar_lea.vmem %s0, %s199
      %p201 = pneg %p37
      %p202 = pneg %p34
      %p203 = pneg %p58
      %p204 = pneg %p55
      %p205 = pneg %p79
      %p206 = pneg %p76
      %p207 = pneg %p100
      %p208 = pneg %p97
      %p209 = pneg %p121
      %p210 = pneg %p118
      %p211 = pneg %p147
      %p212 = pneg %p144
      %s213 = smul.u32 4, %s16
      %p214 = scmp.lt.s32.totalorder %s213, 7
      %s215 = scalar_select %p214, %s213, 7
      %s216 = smul.addr %s215, 4
      %s217 = smul.addr %s216, 8
      %s218 = scalar_lea.vmem %s5, %s217
      %s219 = smul.u32 4, %s16
      %p220 = scmp.lt.s32.totalorder %s219, 7
      %s221 = scalar_select %p220, %s219, 7
      %s222 = smul.addr %s221, 2
      %s223 = smul.addr %s222, 8
      %s224 = scalar_lea.vmem %s0, %s223
      %s225 = smul.u32 4, %s16
      %s226 = smul.u32 4, %s16
      %p227 = scmp.lt.s32.totalorder %s226, 7
      %s228 = scalar_select %p227, %s226, 7
      %s229 = smul.addr %s228, 4
      %s230 = smul.addr %s229, 8
      %s231 = scalar_lea.vmem %s5, %s230
      %s232 = smul.u32 4, %s16
      %v233 = vld [vmem:[%s224] sm:$0xff]
      %v234 = vld [vmem:[%s224 + $0x8] sm:$0xff]
      %v235 = vld [vmem:[%s224 + $0x10] sm:$0xff]
      %v236 = vld [vmem:[%s224 + $0x18] sm:$0xff]
      %v237 = vld [vmem:[%s224 + $0x20] sm:$0xff]
      %v238 = vld [vmem:[%s224 + $0x28] sm:$0xff]
      %v239 = vld [vmem:[%s224 + $0x30] sm:$0xff]
      %v240 = vld [vmem:[%s224 + $0x38] sm:$0xff]
      %v241 = vlaneseq
      %v242 = vshrl.u32 %v241, 7
      %v243 = vadd.s32 %v242, 8
      %v244 = vadd.s32 %v242, 16
      %v245 = vadd.s32 %v242, 24
      %v246 = vadd.s32 %v242, 32
      %v247 = vadd.s32 %v242, 40
      %v248 = vadd.s32 %v242, 48
      %v249 = vadd.s32 %v242, 56
      %vm250 = vcmp.lt.s32.totalorder %v242, 0
      %v251 = vsub.s32 0, %v242
      %v252 = vsel %vm250, %v251, %v242
      %v253 = vshrl.u32 %v252, 4
      %v254 = vand.u32 %v252, 15
      %v255 = vsub.s32 0, %v254
      %v256 = vsel %vm250, %v255, %v254
      %vm257 = vcmp.lt.s32.totalorder %v243, 0
      %v258 = vsub.s32 0, %v243
      %v259 = vsel %vm257, %v258, %v243
      %v260 = vshrl.u32 %v259, 4
      %v261 = vand.u32 %v259, 15
      %v262 = vsub.s32 0, %v261
      %v263 = vsel %vm257, %v262, %v261
      %vm264 = vcmp.lt.s32.totalorder %v244, 0
      %v265 = vsub.s32 0, %v244
      %v266 = vsel %vm264, %v265, %v244
      %v267 = vshrl.u32 %v266, 4
      %v268 = vand.u32 %v266, 15
      %v269 = vsub.s32 0, %v268
      %v270 = vsel %vm264, %v269, %v268
      %vm271 = vcmp.lt.s32.totalorder %v245, 0
      %v272 = vsub.s32 0, %v245
      %v273 = vsel %vm271, %v272, %v245
      %v274 = vshrl.u32 %v273, 4
      %v275 = vand.u32 %v273, 15
      %v276 = vsub.s32 0, %v275
      %v277 = vsel %vm271, %v276, %v275
      %vm278 = vcmp.lt.s32.totalorder %v246, 0
      %v279 = vsub.s32 0, %v246
      %v280 = vsel %vm278, %v279, %v246
      %v281 = vshrl.u32 %v280, 4
      %v282 = vand.u32 %v280, 15
      %v283 = vsub.s32 0, %v282
      %v284 = vsel %vm278, %v283, %v282
      %vm285 = vcmp.lt.s32.totalorder %v247, 0
      %v286 = vsub.s32 0, %v247
      %v287 = vsel %vm285, %v286, %v247
      %v288 = vshrl.u32 %v287, 4
      %v289 = vand.u32 %v287, 15
      %v290 = vsub.s32 0, %v289
      %v291 = vsel %vm285, %v290, %v289
      %vm292 = vcmp.lt.s32.totalorder %v248, 0
      %v293 = vsub.s32 0, %v248
      %v294 = vsel %vm292, %v293, %v248
      %v295 = vshrl.u32 %v294, 4
      %v296 = vand.u32 %v294, 15
      %v297 = vsub.s32 0, %v296
      %v298 = vsel %vm292, %v297, %v296
      %vm299 = vcmp.lt.s32.totalorder %v249, 0
      %v300 = vsub.s32 0, %v249
      %v301 = vsel %vm299, %v300, %v249
      %v302 = vshrl.u32 %v301, 4
      %v303 = vand.u32 %v301, 15
      %v304 = vsub.s32 0, %v303
      %v305 = vsel %vm299, %v304, %v303
      %vm306 = vcmp.ne.s32.totalorder %v256, 0
      %vm307 = vcmp.ne.s32.totalorder %v263, 0
      %vm308 = vcmp.ne.s32.totalorder %v270, 0
      %vm309 = vcmp.ne.s32.totalorder %v277, 0
      %vm310 = vcmp.ne.s32.totalorder %v284, 0
      %vm311 = vcmp.ne.s32.totalorder %v291, 0
      %vm312 = vcmp.ne.s32.totalorder %v298, 0
      %vm313 = vcmp.ne.s32.totalorder %v305, 0
      %vm314 = vcmp.lt.s32.totalorder %v256, 0
      %vm315 = vcmp.lt.s32.totalorder %v263, 0
      %vm316 = vcmp.lt.s32.totalorder %v270, 0
      %vm317 = vcmp.lt.s32.totalorder %v277, 0
      %vm318 = vcmp.lt.s32.totalorder %v284, 0
      %vm319 = vcmp.lt.s32.totalorder %v291, 0
      %vm320 = vcmp.lt.s32.totalorder %v298, 0
      %vm321 = vcmp.lt.s32.totalorder %v305, 0
      %vm322 = vmand %vm314, %vm306
      %vm323 = vmand %vm315, %vm307
      %vm324 = vmand %vm316, %vm308
      %vm325 = vmand %vm317, %vm309
      %vm326 = vmand %vm318, %vm310
      %vm327 = vmand %vm319, %vm311
      %vm328 = vmand %vm320, %vm312
      %vm329 = vmand %vm321, %vm313
      %v330 = vadd.s32 %v256, 16
      %v331 = vadd.s32 %v263, 16
      %v332 = vadd.s32 %v270, 16
      %v333 = vadd.s32 %v277, 16
      %v334 = vadd.s32 %v284, 16
      %v335 = vadd.s32 %v291, 16
      %v336 = vadd.s32 %v298, 16
      %v337 = vadd.s32 %v305, 16
      %v338 = vsel %vm322, %v330, %v256
      %v339 = vsel %vm323, %v331, %v263
      %v340 = vsel %vm324, %v332, %v270
      %v341 = vsel %vm325, %v333, %v277
      %v342 = vsel %vm326, %v334, %v284
      %v343 = vsel %vm327, %v335, %v291
      %v344 = vsel %vm328, %v336, %v298
      %v345 = vsel %vm329, %v337, %v305
      %vm346 = vcmp.eq.s32.totalorder %v338, 15
      %vm347 = vcmp.eq.s32.totalorder %v339, 15
      %vm348 = vcmp.eq.s32.totalorder %v340, 15
      %vm349 = vcmp.eq.s32.totalorder %v341, 15
      %vm350 = vcmp.eq.s32.totalorder %v342, 15
      %vm351 = vcmp.eq.s32.totalorder %v343, 15
      %vm352 = vcmp.eq.s32.totalorder %v344, 15
      %vm353 = vcmp.eq.s32.totalorder %v345, 15
      %vm354 = vcmp.eq.s32.totalorder %v338, 0
      %vm355 = vcmp.eq.s32.totalorder %v339, 0
      %vm356 = vcmp.eq.s32.totalorder %v340, 0
      %vm357 = vcmp.eq.s32.totalorder %v341, 0
      %vm358 = vcmp.eq.s32.totalorder %v342, 0
      %vm359 = vcmp.eq.s32.totalorder %v343, 0
      %vm360 = vcmp.eq.s32.totalorder %v344, 0
      %vm361 = vcmp.eq.s32.totalorder %v345, 0
      %vm370 = vcmask 1046528
      %v371 = vrot.slane %v233, 1
      %v372 = vrot.slane %v234, 1
      %v373 = vsel %vm370, %v371, %v372
      %v374 = vrot.slane %v235, 1
      %v375 = vsel %vm370, %v372, %v374
      %v376 = vrot.slane %v236, 1
      %v377 = vsel %vm370, %v374, %v376
      %v378 = vrot.slane %v237, 1
      %v379 = vsel %vm370, %v376, %v378
      %v380 = vrot.slane %v238, 1
      %v381 = vsel %vm370, %v378, %v380
      %v382 = vrot.slane %v239, 1
      %v383 = vsel %vm370, %v380, %v382
      %v384 = vrot.slane %v240, 1
      %v385 = vsel %vm370, %v382, %v384
      %v394 = vsel %vm370, %v384, 0.0
      %v395 = vsel %vm346, 1, 0
      %v396 = vsel %vm347, 1, 0
      %v397 = vsel %vm348, 1, 0
      %v398 = vsel %vm349, 1, 0
      %v399 = vsel %vm350, 1, 0
      %v400 = vsel %vm351, 1, 0
      %v401 = vsel %vm352, 1, 0
      %v402 = vsel %vm353, 1, 0
      %vm403 = vcmp.eq.s32.totalorder %v395, 1
      %vm404 = vcmp.eq.s32.totalorder %v396, 1
      %vm405 = vcmp.eq.s32.totalorder %v397, 1
      %vm406 = vcmp.eq.s32.totalorder %v398, 1
      %vm407 = vcmp.eq.s32.totalorder %v399, 1
      %vm408 = vcmp.eq.s32.totalorder %v400, 1
      %vm409 = vcmp.eq.s32.totalorder %v401, 1
      %vm410 = vcmp.eq.s32.totalorder %v402, 1
      %v411 = vsel %vm403, 0.0, %v373
      %v412 = vsel %vm404, 0.0, %v375
      %v413 = vsel %vm405, 0.0, %v377
      %v414 = vsel %vm406, 0.0, %v379
      %v415 = vsel %vm407, 0.0, %v381
      %v416 = vsel %vm408, 0.0, %v383
      %v417 = vsel %vm409, 0.0, %v385
      %v418 = vsel %vm410, 0.0, %v394
      %v419 = vpack.c.bf16 %v234, %v233
      %v420 = vpack.c.bf16 %v412, %v411
      %v421 = vpack.c.bf16 %v236, %v235
      %v422 = vpack.c.bf16 %v414, %v413
      %v423 = vpack.c.bf16 %v238, %v237
      %v424 = vpack.c.bf16 %v416, %v415
      %v425 = vpack.c.bf16 %v240, %v239
      %v426 = vpack.c.bf16 %v418, %v417
      %v427 = vld [vmem:[%s1] sm:$0xff]
      %v428 = vld [vmem:[%s1 + $0x8] sm:$0xff]
      %v429 = vld [vmem:[%s1 + $0x10] sm:$0xff]
      %v430 = vld [vmem:[%s1 + $0x18] sm:$0xff]
      %v431 = vld [vmem:[%s1 + $0x20] sm:$0xff]
      %v432 = vld [vmem:[%s1 + $0x28] sm:$0xff]
      %v433 = vld [vmem:[%s1 + $0x30] sm:$0xff]
      %v434 = vld [vmem:[%s1 + $0x38] sm:$0xff]
      %v435 = vld [vmem:[%s1 + $0x40] sm:$0xff]
      %v436 = vld [vmem:[%s1 + $0x48] sm:$0xff]
      %v437 = vld [vmem:[%s1 + $0x50] sm:$0xff]
      %v438 = vld [vmem:[%s1 + $0x58] sm:$0xff]
      %v439 = vld [vmem:[%s1 + $0x60] sm:$0xff]
      %v440 = vld [vmem:[%s1 + $0x68] sm:$0xff]
      %v441 = vld [vmem:[%s1 + $0x70] sm:$0xff]
      %v442 = vld [vmem:[%s1 + $0x78] sm:$0xff]
      %v443 = vld [vmem:[%s1 + $0x80] sm:$0xff]
      %v444 = vld [vmem:[%s1 + $0x88] sm:$0xff]
      %v445 = vld [vmem:[%s1 + $0x90] sm:$0xff]
      %v446 = vld [vmem:[%s1 + $0x98] sm:$0xff]
      %v447 = vld [vmem:[%s1 + $0xa0] sm:$0xff]
      %v448 = vld [vmem:[%s1 + $0xa8] sm:$0xff]
      %v449 = vld [vmem:[%s1 + $0xb0] sm:$0xff]
      %v450 = vld [vmem:[%s1 + $0xb8] sm:$0xff]
      %v451 = vld [vmem:[%s1 + $0xc0] sm:$0xff]
      %v452 = vld [vmem:[%s1 + $0xc8] sm:$0xff]
      %v453 = vld [vmem:[%s1 + $0xd0] sm:$0xff]
      %v454 = vld [vmem:[%s1 + $0xd8] sm:$0xff]
      %v455 = vld [vmem:[%s1 + $0xe0] sm:$0xff]
      %v456 = vld [vmem:[%s1 + $0xe8] sm:$0xff]
      %v457 = vld [vmem:[%s1 + $0xf0] sm:$0xff]
      %v458 = vld [vmem:[%s1 + $0xf8] sm:$0xff]
      %v459 = vld [vmem:[%s1 + $0x100] sm:$0xff]
      %v460 = vld [vmem:[%s1 + $0x108] sm:$0xff]
      %v461 = vld [vmem:[%s1 + $0x110] sm:$0xff]
      %v462 = vld [vmem:[%s1 + $0x118] sm:$0xff]
      %v463 = vld [vmem:[%s1 + $0x120] sm:$0xff]
      %v464 = vld [vmem:[%s1 + $0x128] sm:$0xff]
      %v465 = vld [vmem:[%s1 + $0x130] sm:$0xff]
      %v466 = vld [vmem:[%s1 + $0x138] sm:$0xff]
      %v467 = vld [vmem:[%s1 + $0x140] sm:$0xff]
      %v468 = vld [vmem:[%s1 + $0x148] sm:$0xff]
      %v469 = vld [vmem:[%s1 + $0x150] sm:$0xff]
      %v470 = vld [vmem:[%s1 + $0x158] sm:$0xff]
      %v471 = vld [vmem:[%s1 + $0x160] sm:$0xff]
      %v472 = vld [vmem:[%s1 + $0x168] sm:$0xff]
      %v473 = vld [vmem:[%s1 + $0x170] sm:$0xff]
      %v474 = vld [vmem:[%s1 + $0x178] sm:$0xff]
      %v475 = vld [vmem:[%s1 + $0x180] sm:$0xff]
      %v476 = vld [vmem:[%s1 + $0x188] sm:$0xff]
      %v477 = vld [vmem:[%s1 + $0x190] sm:$0xff]
      %v478 = vld [vmem:[%s1 + $0x198] sm:$0xff]
      %v479 = vld [vmem:[%s1 + $0x1a0] sm:$0xff]
      %v480 = vld [vmem:[%s1 + $0x1a8] sm:$0xff]
      %v481 = vld [vmem:[%s1 + $0x1b0] sm:$0xff]
      %v482 = vld [vmem:[%s1 + $0x1b8] sm:$0xff]
      %v483 = vld [vmem:[%s1 + $0x1c0] sm:$0xff]
      %v484 = vld [vmem:[%s1 + $0x1c8] sm:$0xff]
      %v485 = vld [vmem:[%s1 + $0x1d0] sm:$0xff]
      %v486 = vld [vmem:[%s1 + $0x1d8] sm:$0xff]
      %v487 = vld [vmem:[%s1 + $0x1e0] sm:$0xff]
      %v488 = vld [vmem:[%s1 + $0x1e8] sm:$0xff]
      %v489 = vld [vmem:[%s1 + $0x1f0] sm:$0xff]
      %v490 = vld [vmem:[%s1 + $0x1f8] sm:$0xff]
      %v491 = vld [vmem:[%s2] sm:$0xf]
      %v493 = vlaneseq
      %v494 = vshrl.u32 %v493, 7
      %v495 = vsub.s32 0, %v494
      %v496 = vrot.slane %v491, %v495
      %v497 = vlaneseq
      %v498 = vshrl.u32 %v497, 7
      %v499 = vsub.s32 1, %v498
      %v500 = vrot.slane %v491, %v499
      %v501 = vlaneseq
      %v502 = vshrl.u32 %v501, 7
      %v503 = vsub.s32 2, %v502
      %v504 = vrot.slane %v491, %v503
      %v505 = vlaneseq
      %v506 = vshrl.u32 %v505, 7
      %v507 = vsub.s32 3, %v506
      %v508 = vrot.slane %v491, %v507
      %v577 = vunpack.c.l.b16 %v427
      %v578 = vunpack.c.h.b16 %v427
      %v579 = vunpack.c.l.b16 %v428
      %v580 = vunpack.c.h.b16 %v428
      %v581 = vunpack.c.l.b16 %v429
      %v582 = vunpack.c.h.b16 %v429
      %v583 = vunpack.c.l.b16 %v430
      %v584 = vunpack.c.h.b16 %v430
      %v585 = vunpack.c.l.b16 %v431
      %v586 = vunpack.c.h.b16 %v431
      %v587 = vunpack.c.l.b16 %v432
      %v588 = vunpack.c.h.b16 %v432
      %v589 = vunpack.c.l.b16 %v433
      %v590 = vunpack.c.h.b16 %v433
      %v591 = vunpack.c.l.b16 %v434
      %v592 = vunpack.c.h.b16 %v434
      %v593 = vunpack.c.l.b16 %v435
      %v594 = vunpack.c.h.b16 %v435
      %v595 = vunpack.c.l.b16 %v436
      %v596 = vunpack.c.h.b16 %v436
      %v597 = vunpack.c.l.b16 %v437
      %v598 = vunpack.c.h.b16 %v437
      %v599 = vunpack.c.l.b16 %v438
      %v600 = vunpack.c.h.b16 %v438
      %v601 = vunpack.c.l.b16 %v439
      %v602 = vunpack.c.h.b16 %v439
      %v603 = vunpack.c.l.b16 %v440
      %v604 = vunpack.c.h.b16 %v440
      %v605 = vunpack.c.l.b16 %v441
      %v606 = vunpack.c.h.b16 %v441
      %v607 = vunpack.c.l.b16 %v442
      %v608 = vunpack.c.h.b16 %v442
      %v609 = vunpack.c.l.b16 %v443
      %v610 = vunpack.c.h.b16 %v443
      %v611 = vunpack.c.l.b16 %v444
      %v612 = vunpack.c.h.b16 %v444
      %v613 = vunpack.c.l.b16 %v445
      %v614 = vunpack.c.h.b16 %v445
      %v615 = vunpack.c.l.b16 %v446
      %v616 = vunpack.c.h.b16 %v446
      %v617 = vunpack.c.l.b16 %v447
      %v618 = vunpack.c.h.b16 %v447
      %v619 = vunpack.c.l.b16 %v448
      %v620 = vunpack.c.h.b16 %v448
      %v621 = vunpack.c.l.b16 %v449
      %v622 = vunpack.c.h.b16 %v449
      %v623 = vunpack.c.l.b16 %v450
      %v624 = vunpack.c.h.b16 %v450
      %v625 = vunpack.c.l.b16 %v451
      %v626 = vunpack.c.h.b16 %v451
      %v627 = vunpack.c.l.b16 %v452
      %v628 = vunpack.c.h.b16 %v452
      %v629 = vunpack.c.l.b16 %v453
      %v630 = vunpack.c.h.b16 %v453
      %v631 = vunpack.c.l.b16 %v454
      %v632 = vunpack.c.h.b16 %v454
      %v633 = vunpack.c.l.b16 %v455
      %v634 = vunpack.c.h.b16 %v455
      %v635 = vunpack.c.l.b16 %v456
      %v636 = vunpack.c.h.b16 %v456
      %v637 = vunpack.c.l.b16 %v457
      %v638 = vunpack.c.h.b16 %v457
      %v639 = vunpack.c.l.b16 %v458
      %v640 = vunpack.c.h.b16 %v458
      %v641 = vunpack.c.l.b16 %v459
      %v642 = vunpack.c.h.b16 %v459
      %v643 = vunpack.c.l.b16 %v460
      %v644 = vunpack.c.h.b16 %v460
      %v645 = vunpack.c.l.b16 %v461
      %v646 = vunpack.c.h.b16 %v461
      %v647 = vunpack.c.l.b16 %v462
      %v648 = vunpack.c.h.b16 %v462
      %v649 = vunpack.c.l.b16 %v463
      %v650 = vunpack.c.h.b16 %v463
      %v651 = vunpack.c.l.b16 %v464
      %v652 = vunpack.c.h.b16 %v464
      %v653 = vunpack.c.l.b16 %v465
      %v654 = vunpack.c.h.b16 %v465
      %v655 = vunpack.c.l.b16 %v466
      %v656 = vunpack.c.h.b16 %v466
      %v657 = vunpack.c.l.b16 %v467
      %v658 = vunpack.c.h.b16 %v467
      %v659 = vunpack.c.l.b16 %v468
      %v660 = vunpack.c.h.b16 %v468
      %v661 = vunpack.c.l.b16 %v469
      %v662 = vunpack.c.h.b16 %v469
      %v663 = vunpack.c.l.b16 %v470
      %v664 = vunpack.c.h.b16 %v470
      %v665 = vunpack.c.l.b16 %v471
      %v666 = vunpack.c.h.b16 %v471
      %v667 = vunpack.c.l.b16 %v472
      %v668 = vunpack.c.h.b16 %v472
      %v669 = vunpack.c.l.b16 %v473
      %v670 = vunpack.c.h.b16 %v473
      %v671 = vunpack.c.l.b16 %v474
      %v672 = vunpack.c.h.b16 %v474
      %v673 = vunpack.c.l.b16 %v475
      %v674 = vunpack.c.h.b16 %v475
      %v675 = vunpack.c.l.b16 %v476
      %v676 = vunpack.c.h.b16 %v476
      %v677 = vunpack.c.l.b16 %v477
      %v678 = vunpack.c.h.b16 %v477
      %v679 = vunpack.c.l.b16 %v478
      %v680 = vunpack.c.h.b16 %v478
      %v681 = vunpack.c.l.b16 %v479
      %v682 = vunpack.c.h.b16 %v479
      %v683 = vunpack.c.l.b16 %v480
      %v684 = vunpack.c.h.b16 %v480
      %v685 = vunpack.c.l.b16 %v481
      %v686 = vunpack.c.h.b16 %v481
      %v687 = vunpack.c.l.b16 %v482
      %v688 = vunpack.c.h.b16 %v482
      %v689 = vunpack.c.l.b16 %v483
      %v690 = vunpack.c.h.b16 %v483
      %v691 = vunpack.c.l.b16 %v484
      %v692 = vunpack.c.h.b16 %v484
      %v693 = vunpack.c.l.b16 %v485
      %v694 = vunpack.c.h.b16 %v485
      %v695 = vunpack.c.l.b16 %v486
      %v696 = vunpack.c.h.b16 %v486
      %v697 = vunpack.c.l.b16 %v487
      %v698 = vunpack.c.h.b16 %v487
      %v699 = vunpack.c.l.b16 %v488
      %v700 = vunpack.c.h.b16 %v488
      %v701 = vunpack.c.l.b16 %v489
      %v702 = vunpack.c.h.b16 %v489
      %v703 = vunpack.c.l.b16 %v490
      %v704 = vunpack.c.h.b16 %v490
      %v705 = vpack.c.b16 %v581, %v577
      %v706 = vpack.c.b16 %v582, %v578
      %v707 = vpack.c.b16 %v583, %v579
      %v708 = vpack.c.b16 %v584, %v580
      %v709 = vpack.c.b16 %v589, %v585
      %v710 = vpack.c.b16 %v590, %v586
      %v711 = vpack.c.b16 %v591, %v587
      %v712 = vpack.c.b16 %v592, %v588
      %v713 = vpack.c.b16 %v597, %v593
      %v714 = vpack.c.b16 %v598, %v594
      %v715 = vpack.c.b16 %v599, %v595
      %v716 = vpack.c.b16 %v600, %v596
      %v717 = vpack.c.b16 %v605, %v601
      %v718 = vpack.c.b16 %v606, %v602
      %v719 = vpack.c.b16 %v607, %v603
      %v720 = vpack.c.b16 %v608, %v604
      %v721 = vpack.c.b16 %v613, %v609
      %v722 = vpack.c.b16 %v614, %v610
      %v723 = vpack.c.b16 %v615, %v611
      %v724 = vpack.c.b16 %v616, %v612
      %v725 = vpack.c.b16 %v621, %v617
      %v726 = vpack.c.b16 %v622, %v618
      %v727 = vpack.c.b16 %v623, %v619
      %v728 = vpack.c.b16 %v624, %v620
      %v729 = vpack.c.b16 %v629, %v625
      %v730 = vpack.c.b16 %v630, %v626
      %v731 = vpack.c.b16 %v631, %v627
      %v732 = vpack.c.b16 %v632, %v628
      %v733 = vpack.c.b16 %v637, %v633
      %v734 = vpack.c.b16 %v638, %v634
      %v735 = vpack.c.b16 %v639, %v635
      %v736 = vpack.c.b16 %v640, %v636
      %v737 = vpack.c.b16 %v645, %v641
      %v738 = vpack.c.b16 %v646, %v642
      %v739 = vpack.c.b16 %v647, %v643
      %v740 = vpack.c.b16 %v648, %v644
      %v741 = vpack.c.b16 %v653, %v649
      %v742 = vpack.c.b16 %v654, %v650
      %v743 = vpack.c.b16 %v655, %v651
      %v744 = vpack.c.b16 %v656, %v652
      %v745 = vpack.c.b16 %v661, %v657
      %v746 = vpack.c.b16 %v662, %v658
      %v747 = vpack.c.b16 %v663, %v659
      %v748 = vpack.c.b16 %v664, %v660
      %v749 = vpack.c.b16 %v669, %v665
      %v750 = vpack.c.b16 %v670, %v666
      %v751 = vpack.c.b16 %v671, %v667
      %v752 = vpack.c.b16 %v672, %v668
      %v753 = vpack.c.b16 %v677, %v673
      %v754 = vpack.c.b16 %v678, %v674
      %v755 = vpack.c.b16 %v679, %v675
      %v756 = vpack.c.b16 %v680, %v676
      %v757 = vpack.c.b16 %v685, %v681
      %v758 = vpack.c.b16 %v686, %v682
      %v759 = vpack.c.b16 %v687, %v683
      %v760 = vpack.c.b16 %v688, %v684
      %v761 = vpack.c.b16 %v693, %v689
      %v762 = vpack.c.b16 %v694, %v690
      %v763 = vpack.c.b16 %v695, %v691
      %v764 = vpack.c.b16 %v696, %v692
      %v765 = vpack.c.b16 %v701, %v697
      %v766 = vpack.c.b16 %v702, %v698
      %v767 = vpack.c.b16 %v703, %v699
      %v768 = vpack.c.b16 %v704, %v700
      %833 = vmatprep.subr.bf16.mxu0 %v706
      %834 = vmatpush1.bf16.msra.mxu0 %v705
      %835 = vmatprep.subr.bf16.mxu0 %v710
      %836 = vmatpush1.bf16.msra.mxu0 %v709
      %837 = vmatprep.subr.bf16.mxu0 %v714
      %838 = vmatpush1.bf16.msra.mxu0 %v713
      %839 = vmatprep.subr.bf16.mxu0 %v718
      %840 = vmatpush1.bf16.msra.mxu0 %v717
      %841 = vmatprep.subr.bf16.mxu0 %v722
      %842 = vmatpush1.bf16.msra.mxu0 %v721
      %843 = vmatprep.subr.bf16.mxu0 %v726
      %844 = vmatpush1.bf16.msra.mxu0 %v725
      %845 = vmatprep.subr.bf16.mxu0 %v730
      %846 = vmatpush1.bf16.msra.mxu0 %v729
      %847 = vmatprep.subr.bf16.mxu0 %v734
      %848 = vmatpush1.bf16.msra.mxu0 %v733
      %849 = vmatprep.subr.bf16.mxu0 %v738
      %850 = vmatpush1.bf16.msra.mxu0 %v737
      %851 = vmatprep.subr.bf16.mxu0 %v742
      %852 = vmatpush1.bf16.msra.mxu0 %v741
      %853 = vmatprep.subr.bf16.mxu0 %v746
      %854 = vmatpush1.bf16.msra.mxu0 %v745
      %855 = vmatprep.subr.bf16.mxu0 %v750
      %856 = vmatpush1.bf16.msra.mxu0 %v749
      %857 = vmatprep.subr.bf16.mxu0 %v754
      %858 = vmatpush1.bf16.msra.mxu0 %v753
      %859 = vmatprep.subr.bf16.mxu0 %v758
      %860 = vmatpush1.bf16.msra.mxu0 %v757
      %861 = vmatprep.subr.bf16.mxu0 %v762
      %862 = vmatpush1.bf16.msra.mxu0 %v761
      %863 = vmatprep.subr.bf16.mxu0 %v766
      %864 = vmatpush1.bf16.msra.mxu0 %v765
      %865 = vmatprep.mubr.bf16.mxu0 %v420
      %866 = vmatmul.mubr.bf16.gmra.mrb[0].mxu0 %v419
      %v867 = vpop.f32.mrb[0].mxu0
      %v868 = vadd.f32 %v496, %v867
      %v869 = vpop.f32.mrb[0].mxu0
      %v870 = vadd.f32 %v500, %v869
      %v871 = vpop.f32.mrb[0].mxu0
      %v872 = vadd.f32 %v496, %v871
      %v873 = vpop.f32.mrb[0].mxu0
      %v874 = vadd.f32 %v500, %v873
      %875 = vmatprep.mubr.bf16.mxu0 %v422
      %876 = vmatmul.mubr.bf16.gmra.mrb[0].mxu0 %v421
      %v877 = vpop.f32.mrb[0].mxu0
      %v878 = vadd.f32 %v496, %v877
      %v879 = vpop.f32.mrb[0].mxu0
      %v880 = vadd.f32 %v500, %v879
      %v881 = vpop.f32.mrb[0].mxu0
      %v882 = vadd.f32 %v496, %v881
      %v883 = vpop.f32.mrb[0].mxu0
      %v884 = vadd.f32 %v500, %v883
      %885 = vmatprep.mubr.bf16.mxu0 %v424
      %886 = vmatmul.mubr.bf16.gmra.mrb[0].mxu0 %v423
      %v887 = vpop.f32.mrb[0].mxu0
      %v888 = vadd.f32 %v496, %v887
      %v889 = vpop.f32.mrb[0].mxu0
      %v890 = vadd.f32 %v500, %v889
      %v891 = vpop.f32.mrb[0].mxu0
      %v892 = vadd.f32 %v496, %v891
      %v893 = vpop.f32.mrb[0].mxu0
      %v894 = vadd.f32 %v500, %v893
      %895 = vmatprep.mubr.bf16.mxu0 %v426
      %896 = vmatmul.mubr.bf16.gmra.mrb[0].mxu0 %v425
      %v897 = vpop.f32.mrb[0].mxu0
      %v898 = vadd.f32 %v496, %v897
      %v899 = vpop.f32.mrb[0].mxu0
      %v900 = vadd.f32 %v500, %v899
      %v901 = vpop.f32.mrb[0].mxu0
      %v902 = vadd.f32 %v496, %v901
      %v903 = vpop.f32.mrb[0].mxu0
      %v904 = vadd.f32 %v500, %v903
      %905 = vdwg.mxu0
      %906 = vmatprep.subr.bf16.mxu0 %v708
      %907 = vmatpush1.bf16.msra.mxu0 %v707
      %908 = vmatprep.subr.bf16.mxu0 %v712
      %909 = vmatpush1.bf16.msra.mxu0 %v711
      %910 = vmatprep.subr.bf16.mxu0 %v716
      %911 = vmatpush1.bf16.msra.mxu0 %v715
      %912 = vmatprep.subr.bf16.mxu0 %v720
      %913 = vmatpush1.bf16.msra.mxu0 %v719
      %914 = vmatprep.subr.bf16.mxu0 %v724
      %915 = vmatpush1.bf16.msra.mxu0 %v723
      %916 = vmatprep.subr.bf16.mxu0 %v728
      %917 = vmatpush1.bf16.msra.mxu0 %v727
      %918 = vmatprep.subr.bf16.mxu0 %v732
      %919 = vmatpush1.bf16.msra.mxu0 %v731
      %920 = vmatprep.subr.bf16.mxu0 %v736
      %921 = vmatpush1.bf16.msra.mxu0 %v735
      %922 = vmatprep.subr.bf16.mxu0 %v740
      %923 = vmatpush1.bf16.msra.mxu0 %v739
      %924 = vmatprep.subr.bf16.mxu0 %v744
      %925 = vmatpush1.bf16.msra.mxu0 %v743
      %926 = vmatprep.subr.bf16.mxu0 %v748
      %927 = vmatpush1.bf16.msra.mxu0 %v747
      %928 = vmatprep.subr.bf16.mxu0 %v752
      %929 = vmatpush1.bf16.msra.mxu0 %v751
      %930 = vmatprep.subr.bf16.mxu0 %v756
      %931 = vmatpush1.bf16.msra.mxu0 %v755
      %932 = vmatprep.subr.bf16.mxu0 %v760
      %933 = vmatpush1.bf16.msra.mxu0 %v759
      %934 = vmatprep.subr.bf16.mxu0 %v764
      %935 = vmatpush1.bf16.msra.mxu0 %v763
      %936 = vmatprep.subr.bf16.mxu0 %v768
      %937 = vmatpush1.bf16.msra.mxu0 %v767
      %938 = vmatprep.mubr.bf16.mxu0 %v420
      %939 = vmatmul.mubr.bf16.gmra.mrb[0].mxu0 %v419
      %v940 = vpop.f32.mrb[0].mxu0
      %v941 = vadd.f32 %v504, %v940
      %v942 = vpop.f32.mrb[0].mxu0
      %v943 = vadd.f32 %v508, %v942
      %v944 = vpop.f32.mrb[0].mxu0
      %v945 = vadd.f32 %v504, %v944
      %v946 = vpop.f32.mrb[0].mxu0
      %v947 = vadd.f32 %v508, %v946
      %948 = vmatprep.mubr.bf16.mxu0 %v422
      %949 = vmatmul.mubr.bf16.gmra.mrb[0].mxu0 %v421
      %v950 = vpop.f32.mrb[0].mxu0
      %v951 = vadd.f32 %v504, %v950
      %v952 = vpop.f32.mrb[0].mxu0
      %v953 = vadd.f32 %v508, %v952
      %v954 = vpop.f32.mrb[0].mxu0
      %v955 = vadd.f32 %v504, %v954
      %v956 = vpop.f32.mrb[0].mxu0
      %v957 = vadd.f32 %v508, %v956
      %958 = vmatprep.mubr.bf16.mxu0 %v424
      %959 = vmatmul.mubr.bf16.gmra.mrb[0].mxu0 %v423
      %v960 = vpop.f32.mrb[0].mxu0
      %v961 = vadd.f32 %v504, %v960
      %v962 = vpop.f32.mrb[0].mxu0
      %v963 = vadd.f32 %v508, %v962
      %v964 = vpop.f32.mrb[0].mxu0
      %v965 = vadd.f32 %v504, %v964
      %v966 = vpop.f32.mrb[0].mxu0
      %v967 = vadd.f32 %v508, %v966
      %968 = vmatprep.mubr.bf16.mxu0 %v426
      %969 = vmatmul.mubr.bf16.gmra.mrb[0].mxu0 %v425
      %v970 = vpop.f32.mrb[0].mxu0
      %v971 = vadd.f32 %v504, %v970
      %v972 = vpop.f32.mrb[0].mxu0
      %v973 = vadd.f32 %v508, %v972
      %v974 = vpop.f32.mrb[0].mxu0
      %v975 = vadd.f32 %v504, %v974
      %v976 = vpop.f32.mrb[0].mxu0
      %v977 = vadd.f32 %v508, %v976
      %978 = vdwg.mxu0
      %v979 = vmax.f32 %v868, 0.0
      %v980 = vmax.f32 %v870, 0.0
      %v981 = vmax.f32 %v941, 0.0
      %v982 = vmax.f32 %v943, 0.0
      %v983 = vmax.f32 %v872, 0.0
      %v984 = vmax.f32 %v874, 0.0
      %v985 = vmax.f32 %v945, 0.0
      %v986 = vmax.f32 %v947, 0.0
      %v987 = vmax.f32 %v878, 0.0
      %v988 = vmax.f32 %v880, 0.0
      %v989 = vmax.f32 %v951, 0.0
      %v990 = vmax.f32 %v953, 0.0
      %v991 = vmax.f32 %v882, 0.0
      %v992 = vmax.f32 %v884, 0.0
      %v993 = vmax.f32 %v955, 0.0
      %v994 = vmax.f32 %v957, 0.0
      %v995 = vmax.f32 %v888, 0.0
      %v996 = vmax.f32 %v890, 0.0
      %v997 = vmax.f32 %v961, 0.0
      %v998 = vmax.f32 %v963, 0.0
      %v999 = vmax.f32 %v892, 0.0
      %v1000 = vmax.f32 %v894, 0.0
      %v1001 = vmax.f32 %v965, 0.0
      %v1002 = vmax.f32 %v967, 0.0
      %v1003 = vmax.f32 %v898, 0.0
      %v1004 = vmax.f32 %v900, 0.0
      %v1005 = vmax.f32 %v971, 0.0
      %v1006 = vmax.f32 %v973, 0.0
      %v1007 = vmax.f32 %v902, 0.0
      %v1008 = vmax.f32 %v904, 0.0
      %v1009 = vmax.f32 %v975, 0.0
      %v1010 = vmax.f32 %v977, 0.0
      %vm1027 = vcmask 1040384
      %v1028 = vrot.slane %v981, 7
      %v1029 = vrot.slane %v982, 7
      %v1030 = vrot.slane %v985, 7
      %v1031 = vsel %vm1027, %v1028, %v1030
      %v1032 = vrot.slane %v986, 7
      %v1033 = vsel %vm1027, %v1029, %v1032
      %v1034 = vrot.slane %v989, 7
      %v1035 = vsel %vm1027, %v1030, %v1034
      %v1036 = vrot.slane %v990, 7
      %v1037 = vsel %vm1027, %v1032, %v1036
      %v1038 = vrot.slane %v993, 7
      %v1039 = vsel %vm1027, %v1034, %v1038
      %v1040 = vrot.slane %v994, 7
      %v1041 = vsel %vm1027, %v1036, %v1040
      %v1042 = vrot.slane %v997, 7
      %v1043 = vsel %vm1027, %v1038, %v1042
      %v1044 = vrot.slane %v998, 7
      %v1045 = vsel %vm1027, %v1040, %v1044
      %v1046 = vrot.slane %v1001, 7
      %v1047 = vsel %vm1027, %v1042, %v1046
      %v1048 = vrot.slane %v1002, 7
      %v1049 = vsel %vm1027, %v1044, %v1048
      %v1050 = vrot.slane %v1005, 7
      %v1051 = vsel %vm1027, %v1046, %v1050
      %v1052 = vrot.slane %v1006, 7
      %v1053 = vsel %vm1027, %v1048, %v1052
      %v1054 = vrot.slane %v1009, 7
      %v1055 = vsel %vm1027, %v1050, %v1054
      %v1056 = vrot.slane %v1010, 7
      %v1057 = vsel %vm1027, %v1052, %v1056
      %v1074 = vsel %vm1027, 0.0, %v1028
      %v1075 = vsel %vm1027, 0.0, %v1029
      %v1076 = vsel %vm354, 1, 0
      %v1077 = vsel %vm355, 1, 0
      %v1078 = vsel %vm356, 1, 0
      %v1079 = vsel %vm357, 1, 0
      %v1080 = vsel %vm358, 1, 0
      %v1081 = vsel %vm359, 1, 0
      %v1082 = vsel %vm360, 1, 0
      %v1083 = vsel %vm361, 1, 0
      %vm1084 = vcmp.eq.s32.totalorder %v1076, 1
      %vm1085 = vcmp.eq.s32.totalorder %v1077, 1
      %vm1086 = vcmp.eq.s32.totalorder %v1078, 1
      %vm1087 = vcmp.eq.s32.totalorder %v1079, 1
      %vm1088 = vcmp.eq.s32.totalorder %v1080, 1
      %vm1089 = vcmp.eq.s32.totalorder %v1081, 1
      %vm1090 = vcmp.eq.s32.totalorder %v1082, 1
      %vm1091 = vcmp.eq.s32.totalorder %v1083, 1
      %v1092 = vsel %vm1084, 0.0, %v1074
      %v1093 = vsel %vm1084, 0.0, %v1075
      %v1094 = vsel %vm1085, 0.0, %v1031
      %v1095 = vsel %vm1085, 0.0, %v1033
      %v1096 = vsel %vm1086, 0.0, %v1035
      %v1097 = vsel %vm1086, 0.0, %v1037
      %v1098 = vsel %vm1087, 0.0, %v1039
      %v1099 = vsel %vm1087, 0.0, %v1041
      %v1100 = vsel %vm1088, 0.0, %v1043
      %v1101 = vsel %vm1088, 0.0, %v1045
      %v1102 = vsel %vm1089, 0.0, %v1047
      %v1103 = vsel %vm1089, 0.0, %v1049
      %v1104 = vsel %vm1090, 0.0, %v1051
      %v1105 = vsel %vm1090, 0.0, %v1053
      %v1106 = vsel %vm1091, 0.0, %v1055
      %v1107 = vsel %vm1091, 0.0, %v1057
      %v1124 = vrot.slane %v979, 1
      %v1125 = vrot.slane %v983, 1
      %v1126 = vsel %vm370, %v1124, %v1125
      %v1127 = vrot.slane %v980, 1
      %v1128 = vrot.slane %v984, 1
      %v1129 = vsel %vm370, %v1127, %v1128
      %v1130 = vrot.slane %v987, 1
      %v1131 = vsel %vm370, %v1125, %v1130
      %v1132 = vrot.slane %v988, 1
      %v1133 = vsel %vm370, %v1128, %v1132
      %v1134 = vrot.slane %v991, 1
      %v1135 = vsel %vm370, %v1130, %v1134
      %v1136 = vrot.slane %v992, 1
      %v1137 = vsel %vm370, %v1132, %v1136
      %v1138 = vrot.slane %v995, 1
      %v1139 = vsel %vm370, %v1134, %v1138
      %v1140 = vrot.slane %v996, 1
      %v1141 = vsel %vm370, %v1136, %v1140
      %v1142 = vrot.slane %v999, 1
      %v1143 = vsel %vm370, %v1138, %v1142
      %v1144 = vrot.slane %v1000, 1
      %v1145 = vsel %vm370, %v1140, %v1144
      %v1146 = vrot.slane %v1003, 1
      %v1147 = vsel %vm370, %v1142, %v1146
      %v1148 = vrot.slane %v1004, 1
      %v1149 = vsel %vm370, %v1144, %v1148
      %v1150 = vrot.slane %v1007, 1
      %v1151 = vsel %vm370, %v1146, %v1150
      %v1152 = vrot.slane %v1008, 1
      %v1153 = vsel %vm370, %v1148, %v1152
      %v1170 = vsel %vm370, %v1150, 0.0
      %v1171 = vsel %vm370, %v1152, 0.0
      %v1172 = vsel %vm403, 0.0, %v1126
      %v1173 = vsel %vm403, 0.0, %v1129
      %v1174 = vsel %vm404, 0.0, %v1131
      %v1175 = vsel %vm404, 0.0, %v1133
      %v1176 = vsel %vm405, 0.0, %v1135
      %v1177 = vsel %vm405, 0.0, %v1137
      %v1178 = vsel %vm406, 0.0, %v1139
      %v1179 = vsel %vm406, 0.0, %v1141
      %v1180 = vsel %vm407, 0.0, %v1143
      %v1181 = vsel %vm407, 0.0, %v1145
      %v1182 = vsel %vm408, 0.0, %v1147
      %v1183 = vsel %vm408, 0.0, %v1149
      %v1184 = vsel %vm409, 0.0, %v1151
      %v1185 = vsel %vm409, 0.0, %v1153
      %v1186 = vsel %vm410, 0.0, %v1170
      %v1187 = vsel %vm410, 0.0, %v1171
      %v1188 = vpack.c.bf16 %v1094, %v1092
      %v1189 = vpack.c.bf16 %v1095, %v1093
      %v1190 = vpack.c.bf16 %v983, %v979
      %v1191 = vpack.c.bf16 %v984, %v980
      %v1192 = vpack.c.bf16 %v985, %v981
      %v1193 = vpack.c.bf16 %v986, %v982
      %v1194 = vpack.c.bf16 %v1174, %v1172
      %v1195 = vpack.c.bf16 %v1175, %v1173
      %v1196 = vpack.c.bf16 %v1098, %v1096
      %v1197 = vpack.c.bf16 %v1099, %v1097
      %v1198 = vpack.c.bf16 %v991, %v987
      %v1199 = vpack.c.bf16 %v992, %v988
      %v1200 = vpack.c.bf16 %v993, %v989
      %v1201 = vpack.c.bf16 %v994, %v990
      %v1202 = vpack.c.bf16 %v1178, %v1176
      %v1203 = vpack.c.bf16 %v1179, %v1177
      %v1204 = vpack.c.bf16 %v1102, %v1100
      %v1205 = vpack.c.bf16 %v1103, %v1101
      %v1206 = vpack.c.bf16 %v999, %v995
      %v1207 = vpack.c.bf16 %v1000, %v996
      %v1208 = vpack.c.bf16 %v1001, %v997
      %v1209 = vpack.c.bf16 %v1002, %v998
      %v1210 = vpack.c.bf16 %v1182, %v1180
      %v1211 = vpack.c.bf16 %v1183, %v1181
      %v1212 = vpack.c.bf16 %v1106, %v1104
      %v1213 = vpack.c.bf16 %v1107, %v1105
      %v1214 = vpack.c.bf16 %v1007, %v1003
      %v1215 = vpack.c.bf16 %v1008, %v1004
      %v1216 = vpack.c.bf16 %v1009, %v1005
      %v1217 = vpack.c.bf16 %v1010, %v1006
      %v1218 = vpack.c.bf16 %v1186, %v1184
      %v1219 = vpack.c.bf16 %v1187, %v1185
      %v1220 = vld [vmem:[%s3] sm:$0xff]
      %v1221 = vld [vmem:[%s3 + $0x8] sm:$0xff]
      %v1222 = vld [vmem:[%s3 + $0x10] sm:$0xff]
      %v1223 = vld [vmem:[%s3 + $0x18] sm:$0xff]
      %v1224 = vld [vmem:[%s3 + $0x20] sm:$0xff]
      %v1225 = vld [vmem:[%s3 + $0x28] sm:$0xff]
      %v1226 = vld [vmem:[%s3 + $0x30] sm:$0xff]
      %v1227 = vld [vmem:[%s3 + $0x38] sm:$0xff]
      %v1228 = vld [vmem:[%s3 + $0x40] sm:$0xff]
      %v1229 = vld [vmem:[%s3 + $0x48] sm:$0xff]
      %v1230 = vld [vmem:[%s3 + $0x50] sm:$0xff]
      %v1231 = vld [vmem:[%s3 + $0x58] sm:$0xff]
      %v1232 = vld [vmem:[%s3 + $0x60] sm:$0xff]
      %v1233 = vld [vmem:[%s3 + $0x68] sm:$0xff]
      %v1234 = vld [vmem:[%s3 + $0x70] sm:$0xff]
      %v1235 = vld [vmem:[%s3 + $0x78] sm:$0xff]
      %v1236 = vld [vmem:[%s3 + $0x80] sm:$0xff]
      %v1237 = vld [vmem:[%s3 + $0x88] sm:$0xff]
      %v1238 = vld [vmem:[%s3 + $0x90] sm:$0xff]
      %v1239 = vld [vmem:[%s3 + $0x98] sm:$0xff]
      %v1240 = vld [vmem:[%s3 + $0xa0] sm:$0xff]
      %v1241 = vld [vmem:[%s3 + $0xa8] sm:$0xff]
      %v1242 = vld [vmem:[%s3 + $0xb0] sm:$0xff]
      %v1243 = vld [vmem:[%s3 + $0xb8] sm:$0xff]
      %v1244 = vld [vmem:[%s3 + $0xc0] sm:$0xff]
      %v1245 = vld [vmem:[%s3 + $0xc8] sm:$0xff]
      %v1246 = vld [vmem:[%s3 + $0xd0] sm:$0xff]
      %v1247 = vld [vmem:[%s3 + $0xd8] sm:$0xff]
      %v1248 = vld [vmem:[%s3 + $0xe0] sm:$0xff]
      %v1249 = vld [vmem:[%s3 + $0xe8] sm:$0xff]
      %v1250 = vld [vmem:[%s3 + $0xf0] sm:$0xff]
      %v1251 = vld [vmem:[%s3 + $0xf8] sm:$0xff]
      %v1252 = vld [vmem:[%s3 + $0x100] sm:$0xff]
      %v1253 = vld [vmem:[%s3 + $0x108] sm:$0xff]
      %v1254 = vld [vmem:[%s3 + $0x110] sm:$0xff]
      %v1255 = vld [vmem:[%s3 + $0x118] sm:$0xff]
      %v1256 = vld [vmem:[%s3 + $0x120] sm:$0xff]
      %v1257 = vld [vmem:[%s3 + $0x128] sm:$0xff]
      %v1258 = vld [vmem:[%s3 + $0x130] sm:$0xff]
      %v1259 = vld [vmem:[%s3 + $0x138] sm:$0xff]
      %v1260 = vld [vmem:[%s3 + $0x140] sm:$0xff]
      %v1261 = vld [vmem:[%s3 + $0x148] sm:$0xff]
      %v1262 = vld [vmem:[%s3 + $0x150] sm:$0xff]
      %v1263 = vld [vmem:[%s3 + $0x158] sm:$0xff]
      %v1264 = vld [vmem:[%s3 + $0x160] sm:$0xff]
      %v1265 = vld [vmem:[%s3 + $0x168] sm:$0xff]
      %v1266 = vld [vmem:[%s3 + $0x170] sm:$0xff]
      %v1267 = vld [vmem:[%s3 + $0x178] sm:$0xff]
      %v1268 = vld [vmem:[%s3 + $0x180] sm:$0xff]
      %v1269 = vld [vmem:[%s3 + $0x188] sm:$0xff]
      %v1270 = vld [vmem:[%s3 + $0x190] sm:$0xff]
      %v1271 = vld [vmem:[%s3 + $0x198] sm:$0xff]
      %v1272 = vld [vmem:[%s3 + $0x1a0] sm:$0xff]
      %v1273 = vld [vmem:[%s3 + $0x1a8] sm:$0xff]
      %v1274 = vld [vmem:[%s3 + $0x1b0] sm:$0xff]
      %v1275 = vld [vmem:[%s3 + $0x1b8] sm:$0xff]
      %v1276 = vld [vmem:[%s3 + $0x1c0] sm:$0xff]
      %v1277 = vld [vmem:[%s3 + $0x1c8] sm:$0xff]
      %v1278 = vld [vmem:[%s3 + $0x1d0] sm:$0xff]
      %v1279 = vld [vmem:[%s3 + $0x1d8] sm:$0xff]
      %v1280 = vld [vmem:[%s3 + $0x1e0] sm:$0xff]
      %v1281 = vld [vmem:[%s3 + $0x1e8] sm:$0xff]
      %v1282 = vld [vmem:[%s3 + $0x1f0] sm:$0xff]
      %v1283 = vld [vmem:[%s3 + $0x1f8] sm:$0xff]
      %v1284 = vld [vmem:[%s3 + $0x200] sm:$0xff]
      %v1285 = vld [vmem:[%s3 + $0x208] sm:$0xff]
      %v1286 = vld [vmem:[%s3 + $0x210] sm:$0xff]
      %v1287 = vld [vmem:[%s3 + $0x218] sm:$0xff]
      %v1288 = vld [vmem:[%s3 + $0x220] sm:$0xff]
      %v1289 = vld [vmem:[%s3 + $0x228] sm:$0xff]
      %v1290 = vld [vmem:[%s3 + $0x230] sm:$0xff]
      %v1291 = vld [vmem:[%s3 + $0x238] sm:$0xff]
      %v1292 = vld [vmem:[%s3 + $0x240] sm:$0xff]
      %v1293 = vld [vmem:[%s3 + $0x248] sm:$0xff]
      %v1294 = vld [vmem:[%s3 + $0x250] sm:$0xff]
      %v1295 = vld [vmem:[%s3 + $0x258] sm:$0xff]
      %v1296 = vld [vmem:[%s3 + $0x260] sm:$0xff]
      %v1297 = vld [vmem:[%s3 + $0x268] sm:$0xff]
      %v1298 = vld [vmem:[%s3 + $0x270] sm:$0xff]
      %v1299 = vld [vmem:[%s3 + $0x278] sm:$0xff]
      %v1300 = vld [vmem:[%s3 + $0x280] sm:$0xff]
      %v1301 = vld [vmem:[%s3 + $0x288] sm:$0xff]
      %v1302 = vld [vmem:[%s3 + $0x290] sm:$0xff]
      %v1303 = vld [vmem:[%s3 + $0x298] sm:$0xff]
      %v1304 = vld [vmem:[%s3 + $0x2a0] sm:$0xff]
      %v1305 = vld [vmem:[%s3 + $0x2a8] sm:$0xff]
      %v1306 = vld [vmem:[%s3 + $0x2b0] sm:$0xff]
      %v1307 = vld [vmem:[%s3 + $0x2b8] sm:$0xff]
      %v1308 = vld [vmem:[%s3 + $0x2c0] sm:$0xff]
      %v1309 = vld [vmem:[%s3 + $0x2c8] sm:$0xff]
      %v1310 = vld [vmem:[%s3 + $0x2d0] sm:$0xff]
      %v1311 = vld [vmem:[%s3 + $0x2d8] sm:$0xff]
      %v1312 = vld [vmem:[%s3 + $0x2e0] sm:$0xff]
      %v1313 = vld [vmem:[%s3 + $0x2e8] sm:$0xff]
      %v1314 = vld [vmem:[%s3 + $0x2f0] sm:$0xff]
      %v1315 = vld [vmem:[%s3 + $0x2f8] sm:$0xff]
      %v1316 = vld [vmem:[%s3 + $0x300] sm:$0xff]
      %v1317 = vld [vmem:[%s3 + $0x308] sm:$0xff]
      %v1318 = vld [vmem:[%s3 + $0x310] sm:$0xff]
      %v1319 = vld [vmem:[%s3 + $0x318] sm:$0xff]
      %v1320 = vld [vmem:[%s3 + $0x320] sm:$0xff]
      %v1321 = vld [vmem:[%s3 + $0x328] sm:$0xff]
      %v1322 = vld [vmem:[%s3 + $0x330] sm:$0xff]
      %v1323 = vld [vmem:[%s3 + $0x338] sm:$0xff]
      %v1324 = vld [vmem:[%s3 + $0x340] sm:$0xff]
      %v1325 = vld [vmem:[%s3 + $0x348] sm:$0xff]
      %v1326 = vld [vmem:[%s3 + $0x350] sm:$0xff]
      %v1327 = vld [vmem:[%s3 + $0x358] sm:$0xff]
      %v1328 = vld [vmem:[%s3 + $0x360] sm:$0xff]
      %v1329 = vld [vmem:[%s3 + $0x368] sm:$0xff]
      %v1330 = vld [vmem:[%s3 + $0x370] sm:$0xff]
      %v1331 = vld [vmem:[%s3 + $0x378] sm:$0xff]
      %v1332 = vld [vmem:[%s3 + $0x380] sm:$0xff]
      %v1333 = vld [vmem:[%s3 + $0x388] sm:$0xff]
      %v1334 = vld [vmem:[%s3 + $0x390] sm:$0xff]
      %v1335 = vld [vmem:[%s3 + $0x398] sm:$0xff]
      %v1336 = vld [vmem:[%s3 + $0x3a0] sm:$0xff]
      %v1337 = vld [vmem:[%s3 + $0x3a8] sm:$0xff]
      %v1338 = vld [vmem:[%s3 + $0x3b0] sm:$0xff]
      %v1339 = vld [vmem:[%s3 + $0x3b8] sm:$0xff]
      %v1340 = vld [vmem:[%s3 + $0x3c0] sm:$0xff]
      %v1341 = vld [vmem:[%s3 + $0x3c8] sm:$0xff]
      %v1342 = vld [vmem:[%s3 + $0x3d0] sm:$0xff]
      %v1343 = vld [vmem:[%s3 + $0x3d8] sm:$0xff]
      %v1344 = vld [vmem:[%s3 + $0x3e0] sm:$0xff]
      %v1345 = vld [vmem:[%s3 + $0x3e8] sm:$0xff]
      %v1346 = vld [vmem:[%s3 + $0x3f0] sm:$0xff]
      %v1347 = vld [vmem:[%s3 + $0x3f8] sm:$0xff]
      %v1476 = vunpack.c.l.b16 %v1220
      %v1477 = vunpack.c.h.b16 %v1220
      %v1478 = vunpack.c.l.b16 %v1221
      %v1479 = vunpack.c.h.b16 %v1221
      %v1480 = vunpack.c.l.b16 %v1222
      %v1481 = vunpack.c.h.b16 %v1222
      %v1482 = vunpack.c.l.b16 %v1223
      %v1483 = vunpack.c.h.b16 %v1223
      %v1484 = vunpack.c.l.b16 %v1224
      %v1485 = vunpack.c.h.b16 %v1224
      %v1486 = vunpack.c.l.b16 %v1225
      %v1487 = vunpack.c.h.b16 %v1225
      %v1488 = vunpack.c.l.b16 %v1226
      %v1489 = vunpack.c.h.b16 %v1226
      %v1490 = vunpack.c.l.b16 %v1227
      %v1491 = vunpack.c.h.b16 %v1227
      %v1492 = vunpack.c.l.b16 %v1228
      %v1493 = vunpack.c.h.b16 %v1228
      %v1494 = vunpack.c.l.b16 %v1229
      %v1495 = vunpack.c.h.b16 %v1229
      %v1496 = vunpack.c.l.b16 %v1230
      %v1497 = vunpack.c.h.b16 %v1230
      %v1498 = vunpack.c.l.b16 %v1231
      %v1499 = vunpack.c.h.b16 %v1231
      %v1500 = vunpack.c.l.b16 %v1232
      %v1501 = vunpack.c.h.b16 %v1232
      %v1502 = vunpack.c.l.b16 %v1233
      %v1503 = vunpack.c.h.b16 %v1233
      %v1504 = vunpack.c.l.b16 %v1234
      %v1505 = vunpack.c.h.b16 %v1234
      %v1506 = vunpack.c.l.b16 %v1235
      %v1507 = vunpack.c.h.b16 %v1235
      %v1508 = vunpack.c.l.b16 %v1236
      %v1509 = vunpack.c.h.b16 %v1236
      %v1510 = vunpack.c.l.b16 %v1237
      %v1511 = vunpack.c.h.b16 %v1237
      %v1512 = vunpack.c.l.b16 %v1238
      %v1513 = vunpack.c.h.b16 %v1238
      %v1514 = vunpack.c.l.b16 %v1239
      %v1515 = vunpack.c.h.b16 %v1239
      %v1516 = vunpack.c.l.b16 %v1240
      %v1517 = vunpack.c.h.b16 %v1240
      %v1518 = vunpack.c.l.b16 %v1241
      %v1519 = vunpack.c.h.b16 %v1241
      %v1520 = vunpack.c.l.b16 %v1242
      %v1521 = vunpack.c.h.b16 %v1242
      %v1522 = vunpack.c.l.b16 %v1243
      %v1523 = vunpack.c.h.b16 %v1243
      %v1524 = vunpack.c.l.b16 %v1244
      %v1525 = vunpack.c.h.b16 %v1244
      %v1526 = vunpack.c.l.b16 %v1245
      %v1527 = vunpack.c.h.b16 %v1245
      %v1528 = vunpack.c.l.b16 %v1246
      %v1529 = vunpack.c.h.b16 %v1246
      %v1530 = vunpack.c.l.b16 %v1247
      %v1531 = vunpack.c.h.b16 %v1247
      %v1532 = vunpack.c.l.b16 %v1248
      %v1533 = vunpack.c.h.b16 %v1248
      %v1534 = vunpack.c.l.b16 %v1249
      %v1535 = vunpack.c.h.b16 %v1249
      %v1536 = vunpack.c.l.b16 %v1250
      %v1537 = vunpack.c.h.b16 %v1250
      %v1538 = vunpack.c.l.b16 %v1251
      %v1539 = vunpack.c.h.b16 %v1251
      %v1540 = vunpack.c.l.b16 %v1252
      %v1541 = vunpack.c.h.b16 %v1252
      %v1542 = vunpack.c.l.b16 %v1253
      %v1543 = vunpack.c.h.b16 %v1253
      %v1544 = vunpack.c.l.b16 %v1254
      %v1545 = vunpack.c.h.b16 %v1254
      %v1546 = vunpack.c.l.b16 %v1255
      %v1547 = vunpack.c.h.b16 %v1255
      %v1548 = vunpack.c.l.b16 %v1256
      %v1549 = vunpack.c.h.b16 %v1256
      %v1550 = vunpack.c.l.b16 %v1257
      %v1551 = vunpack.c.h.b16 %v1257
      %v1552 = vunpack.c.l.b16 %v1258
      %v1553 = vunpack.c.h.b16 %v1258
      %v1554 = vunpack.c.l.b16 %v1259
      %v1555 = vunpack.c.h.b16 %v1259
      %v1556 = vunpack.c.l.b16 %v1260
      %v1557 = vunpack.c.h.b16 %v1260
      %v1558 = vunpack.c.l.b16 %v1261
      %v1559 = vunpack.c.h.b16 %v1261
      %v1560 = vunpack.c.l.b16 %v1262
      %v1561 = vunpack.c.h.b16 %v1262
      %v1562 = vunpack.c.l.b16 %v1263
      %v1563 = vunpack.c.h.b16 %v1263
      %v1564 = vunpack.c.l.b16 %v1264
      %v1565 = vunpack.c.h.b16 %v1264
      %v1566 = vunpack.c.l.b16 %v1265
      %v1567 = vunpack.c.h.b16 %v1265
      %v1568 = vunpack.c.l.b16 %v1266
      %v1569 = vunpack.c.h.b16 %v1266
      %v1570 = vunpack.c.l.b16 %v1267
      %v1571 = vunpack.c.h.b16 %v1267
      %v1572 = vunpack.c.l.b16 %v1268
      %v1573 = vunpack.c.h.b16 %v1268
      %v1574 = vunpack.c.l.b16 %v1269
      %v1575 = vunpack.c.h.b16 %v1269
      %v1576 = vunpack.c.l.b16 %v1270
      %v1577 = vunpack.c.h.b16 %v1270
      %v1578 = vunpack.c.l.b16 %v1271
      %v1579 = vunpack.c.h.b16 %v1271
      %v1580 = vunpack.c.l.b16 %v1272
      %v1581 = vunpack.c.h.b16 %v1272
      %v1582 = vunpack.c.l.b16 %v1273
      %v1583 = vunpack.c.h.b16 %v1273
      %v1584 = vunpack.c.l.b16 %v1274
      %v1585 = vunpack.c.h.b16 %v1274
      %v1586 = vunpack.c.l.b16 %v1275
      %v1587 = vunpack.c.h.b16 %v1275
      %v1588 = vunpack.c.l.b16 %v1276
      %v1589 = vunpack.c.h.b16 %v1276
      %v1590 = vunpack.c.l.b16 %v1277
      %v1591 = vunpack.c.h.b16 %v1277
      %v1592 = vunpack.c.l.b16 %v1278
      %v1593 = vunpack.c.h.b16 %v1278
      %v1594 = vunpack.c.l.b16 %v1279
      %v1595 = vunpack.c.h.b16 %v1279
      %v1596 = vunpack.c.l.b16 %v1280
      %v1597 = vunpack.c.h.b16 %v1280
      %v1598 = vunpack.c.l.b16 %v1281
      %v1599 = vunpack.c.h.b16 %v1281
      %v1600 = vunpack.c.l.b16 %v1282
      %v1601 = vunpack.c.h.b16 %v1282
      %v1602 = vunpack.c.l.b16 %v1283
      %v1603 = vunpack.c.h.b16 %v1283
      %v1604 = vunpack.c.l.b16 %v1284
      %v1605 = vunpack.c.h.b16 %v1284
      %v1606 = vunpack.c.l.b16 %v1285
      %v1607 = vunpack.c.h.b16 %v1285
      %v1608 = vunpack.c.l.b16 %v1286
      %v1609 = vunpack.c.h.b16 %v1286
      %v1610 = vunpack.c.l.b16 %v1287
      %v1611 = vunpack.c.h.b16 %v1287
      %v1612 = vunpack.c.l.b16 %v1288
      %v1613 = vunpack.c.h.b16 %v1288
      %v1614 = vunpack.c.l.b16 %v1289
      %v1615 = vunpack.c.h.b16 %v1289
      %v1616 = vunpack.c.l.b16 %v1290
      %v1617 = vunpack.c.h.b16 %v1290
      %v1618 = vunpack.c.l.b16 %v1291
      %v1619 = vunpack.c.h.b16 %v1291
      %v1620 = vunpack.c.l.b16 %v1292
      %v1621 = vunpack.c.h.b16 %v1292
      %v1622 = vunpack.c.l.b16 %v1293
      %v1623 = vunpack.c.h.b16 %v1293
      %v1624 = vunpack.c.l.b16 %v1294
      %v1625 = vunpack.c.h.b16 %v1294
      %v1626 = vunpack.c.l.b16 %v1295
      %v1627 = vunpack.c.h.b16 %v1295
      %v1628 = vunpack.c.l.b16 %v1296
      %v1629 = vunpack.c.h.b16 %v1296
      %v1630 = vunpack.c.l.b16 %v1297
      %v1631 = vunpack.c.h.b16 %v1297
      %v1632 = vunpack.c.l.b16 %v1298
      %v1633 = vunpack.c.h.b16 %v1298
      %v1634 = vunpack.c.l.b16 %v1299
      %v1635 = vunpack.c.h.b16 %v1299
      %v1636 = vunpack.c.l.b16 %v1300
      %v1637 = vunpack.c.h.b16 %v1300
      %v1638 = vunpack.c.l.b16 %v1301
      %v1639 = vunpack.c.h.b16 %v1301
      %v1640 = vunpack.c.l.b16 %v1302
      %v1641 = vunpack.c.h.b16 %v1302
      %v1642 = vunpack.c.l.b16 %v1303
      %v1643 = vunpack.c.h.b16 %v1303
      %v1644 = vunpack.c.l.b16 %v1304
      %v1645 = vunpack.c.h.b16 %v1304
      %v1646 = vunpack.c.l.b16 %v1305
      %v1647 = vunpack.c.h.b16 %v1305
      %v1648 = vunpack.c.l.b16 %v1306
      %v1649 = vunpack.c.h.b16 %v1306
      %v1650 = vunpack.c.l.b16 %v1307
      %v1651 = vunpack.c.h.b16 %v1307
      %v1652 = vunpack.c.l.b16 %v1308
      %v1653 = vunpack.c.h.b16 %v1308
      %v1654 = vunpack.c.l.b16 %v1309
      %v1655 = vunpack.c.h.b16 %v1309
      %v1656 = vunpack.c.l.b16 %v1310
      %v1657 = vunpack.c.h.b16 %v1310
      %v1658 = vunpack.c.l.b16 %v1311
      %v1659 = vunpack.c.h.b16 %v1311
      %v1660 = vunpack.c.l.b16 %v1312
      %v1661 = vunpack.c.h.b16 %v1312
      %v1662 = vunpack.c.l.b16 %v1313
      %v1663 = vunpack.c.h.b16 %v1313
      %v1664 = vunpack.c.l.b16 %v1314
      %v1665 = vunpack.c.h.b16 %v1314
      %v1666 = vunpack.c.l.b16 %v1315
      %v1667 = vunpack.c.h.b16 %v1315
      %v1668 = vunpack.c.l.b16 %v1316
      %v1669 = vunpack.c.h.b16 %v1316
      %v1670 = vunpack.c.l.b16 %v1317
      %v1671 = vunpack.c.h.b16 %v1317
      %v1672 = vunpack.c.l.b16 %v1318
      %v1673 = vunpack.c.h.b16 %v1318
      %v1674 = vunpack.c.l.b16 %v1319
      %v1675 = vunpack.c.h.b16 %v1319
      %v1676 = vunpack.c.l.b16 %v1320
      %v1677 = vunpack.c.h.b16 %v1320
      %v1678 = vunpack.c.l.b16 %v1321
      %v1679 = vunpack.c.h.b16 %v1321
      %v1680 = vunpack.c.l.b16 %v1322
      %v1681 = vunpack.c.h.b16 %v1322
      %v1682 = vunpack.c.l.b16 %v1323
      %v1683 = vunpack.c.h.b16 %v1323
      %v1684 = vunpack.c.l.b16 %v1324
      %v1685 = vunpack.c.h.b16 %v1324
      %v1686 = vunpack.c.l.b16 %v1325
      %v1687 = vunpack.c.h.b16 %v1325
      %v1688 = vunpack.c.l.b16 %v1326
      %v1689 = vunpack.c.h.b16 %v1326
      %v1690 = vunpack.c.l.b16 %v1327
      %v1691 = vunpack.c.h.b16 %v1327
      %v1692 = vunpack.c.l.b16 %v1328
      %v1693 = vunpack.c.h.b16 %v1328
      %v1694 = vunpack.c.l.b16 %v1329
      %v1695 = vunpack.c.h.b16 %v1329
      %v1696 = vunpack.c.l.b16 %v1330
      %v1697 = vunpack.c.h.b16 %v1330
      %v1698 = vunpack.c.l.b16 %v1331
      %v1699 = vunpack.c.h.b16 %v1331
      %v1700 = vunpack.c.l.b16 %v1332
      %v1701 = vunpack.c.h.b16 %v1332
      %v1702 = vunpack.c.l.b16 %v1333
      %v1703 = vunpack.c.h.b16 %v1333
      %v1704 = vunpack.c.l.b16 %v1334
      %v1705 = vunpack.c.h.b16 %v1334
      %v1706 = vunpack.c.l.b16 %v1335
      %v1707 = vunpack.c.h.b16 %v1335
      %v1708 = vunpack.c.l.b16 %v1336
      %v1709 = vunpack.c.h.b16 %v1336
      %v1710 = vunpack.c.l.b16 %v1337
      %v1711 = vunpack.c.h.b16 %v1337
      %v1712 = vunpack.c.l.b16 %v1338
      %v1713 = vunpack.c.h.b16 %v1338
      %v1714 = vunpack.c.l.b16 %v1339
      %v1715 = vunpack.c.h.b16 %v1339
      %v1716 = vunpack.c.l.b16 %v1340
      %v1717 = vunpack.c.h.b16 %v1340
      %v1718 = vunpack.c.l.b16 %v1341
      %v1719 = vunpack.c.h.b16 %v1341
      %v1720 = vunpack.c.l.b16 %v1342
      %v1721 = vunpack.c.h.b16 %v1342
      %v1722 = vunpack.c.l.b16 %v1343
      %v1723 = vunpack.c.h.b16 %v1343
      %v1724 = vunpack.c.l.b16 %v1344
      %v1725 = vunpack.c.h.b16 %v1344
      %v1726 = vunpack.c.l.b16 %v1345
      %v1727 = vunpack.c.h.b16 %v1345
      %v1728 = vunpack.c.l.b16 %v1346
      %v1729 = vunpack.c.h.b16 %v1346
      %v1730 = vunpack.c.l.b16 %v1347
      %v1731 = vunpack.c.h.b16 %v1347
      %v1732 = vpack.c.b16 %v1478, %v1476
      %v1733 = vpack.c.b16 %v1479, %v1477
      %v1734 = vpack.c.b16 %v1482, %v1480
      %v1735 = vpack.c.b16 %v1483, %v1481
      %v1736 = vpack.c.b16 %v1486, %v1484
      %v1737 = vpack.c.b16 %v1487, %v1485
      %v1738 = vpack.c.b16 %v1490, %v1488
      %v1739 = vpack.c.b16 %v1491, %v1489
      %v1740 = vpack.c.b16 %v1494, %v1492
      %v1741 = vpack.c.b16 %v1495, %v1493
      %v1742 = vpack.c.b16 %v1498, %v1496
      %v1743 = vpack.c.b16 %v1499, %v1497
      %v1744 = vpack.c.b16 %v1502, %v1500
      %v1745 = vpack.c.b16 %v1503, %v1501
      %v1746 = vpack.c.b16 %v1506, %v1504
      %v1747 = vpack.c.b16 %v1507, %v1505
      %v1748 = vpack.c.b16 %v1510, %v1508
      %v1749 = vpack.c.b16 %v1511, %v1509
      %v1750 = vpack.c.b16 %v1514, %v1512
      %v1751 = vpack.c.b16 %v1515, %v1513
      %v1752 = vpack.c.b16 %v1518, %v1516
      %v1753 = vpack.c.b16 %v1519, %v1517
      %v1754 = vpack.c.b16 %v1522, %v1520
      %v1755 = vpack.c.b16 %v1523, %v1521
      %v1756 = vpack.c.b16 %v1526, %v1524
      %v1757 = vpack.c.b16 %v1527, %v1525
      %v1758 = vpack.c.b16 %v1530, %v1528
      %v1759 = vpack.c.b16 %v1531, %v1529
      %v1760 = vpack.c.b16 %v1534, %v1532
      %v1761 = vpack.c.b16 %v1535, %v1533
      %v1762 = vpack.c.b16 %v1538, %v1536
      %v1763 = vpack.c.b16 %v1539, %v1537
      %v1764 = vpack.c.b16 %v1542, %v1540
      %v1765 = vpack.c.b16 %v1543, %v1541
      %v1766 = vpack.c.b16 %v1546, %v1544
      %v1767 = vpack.c.b16 %v1547, %v1545
      %v1768 = vpack.c.b16 %v1550, %v1548
      %v1769 = vpack.c.b16 %v1551, %v1549
      %v1770 = vpack.c.b16 %v1554, %v1552
      %v1771 = vpack.c.b16 %v1555, %v1553
      %v1772 = vpack.c.b16 %v1558, %v1556
      %v1773 = vpack.c.b16 %v1559, %v1557
      %v1774 = vpack.c.b16 %v1562, %v1560
      %v1775 = vpack.c.b16 %v1563, %v1561
      %v1776 = vpack.c.b16 %v1566, %v1564
      %v1777 = vpack.c.b16 %v1567, %v1565
      %v1778 = vpack.c.b16 %v1570, %v1568
      %v1779 = vpack.c.b16 %v1571, %v1569
      %v1780 = vpack.c.b16 %v1574, %v1572
      %v1781 = vpack.c.b16 %v1575, %v1573
      %v1782 = vpack.c.b16 %v1578, %v1576
      %v1783 = vpack.c.b16 %v1579, %v1577
      %v1784 = vpack.c.b16 %v1582, %v1580
      %v1785 = vpack.c.b16 %v1583, %v1581
      %v1786 = vpack.c.b16 %v1586, %v1584
      %v1787 = vpack.c.b16 %v1587, %v1585
      %v1788 = vpack.c.b16 %v1590, %v1588
      %v1789 = vpack.c.b16 %v1591, %v1589
      %v1790 = vpack.c.b16 %v1594, %v1592
      %v1791 = vpack.c.b16 %v1595, %v1593
      %v1792 = vpack.c.b16 %v1598, %v1596
      %v1793 = vpack.c.b16 %v1599, %v1597
      %v1794 = vpack.c.b16 %v1602, %v1600
      %v1795 = vpack.c.b16 %v1603, %v1601
      %v1796 = vpack.c.b16 %v1606, %v1604
      %v1797 = vpack.c.b16 %v1607, %v1605
      %v1798 = vpack.c.b16 %v1610, %v1608
      %v1799 = vpack.c.b16 %v1611, %v1609
      %v1800 = vpack.c.b16 %v1614, %v1612
      %v1801 = vpack.c.b16 %v1615, %v1613
      %v1802 = vpack.c.b16 %v1618, %v1616
      %v1803 = vpack.c.b16 %v1619, %v1617
      %v1804 = vpack.c.b16 %v1622, %v1620
      %v1805 = vpack.c.b16 %v1623, %v1621
      %v1806 = vpack.c.b16 %v1626, %v1624
      %v1807 = vpack.c.b16 %v1627, %v1625
      %v1808 = vpack.c.b16 %v1630, %v1628
      %v1809 = vpack.c.b16 %v1631, %v1629
      %v1810 = vpack.c.b16 %v1634, %v1632
      %v1811 = vpack.c.b16 %v1635, %v1633
      %v1812 = vpack.c.b16 %v1638, %v1636
      %v1813 = vpack.c.b16 %v1639, %v1637
      %v1814 = vpack.c.b16 %v1642, %v1640
      %v1815 = vpack.c.b16 %v1643, %v1641
      %v1816 = vpack.c.b16 %v1646, %v1644
      %v1817 = vpack.c.b16 %v1647, %v1645
      %v1818 = vpack.c.b16 %v1650, %v1648
      %v1819 = vpack.c.b16 %v1651, %v1649
      %v1820 = vpack.c.b16 %v1654, %v1652
      %v1821 = vpack.c.b16 %v1655, %v1653
      %v1822 = vpack.c.b16 %v1658, %v1656
      %v1823 = vpack.c.b16 %v1659, %v1657
      %v1824 = vpack.c.b16 %v1662, %v1660
      %v1825 = vpack.c.b16 %v1663, %v1661
      %v1826 = vpack.c.b16 %v1666, %v1664
      %v1827 = vpack.c.b16 %v1667, %v1665
      %v1828 = vpack.c.b16 %v1670, %v1668
      %v1829 = vpack.c.b16 %v1671, %v1669
      %v1830 = vpack.c.b16 %v1674, %v1672
      %v1831 = vpack.c.b16 %v1675, %v1673
      %v1832 = vpack.c.b16 %v1678, %v1676
      %v1833 = vpack.c.b16 %v1679, %v1677
      %v1834 = vpack.c.b16 %v1682, %v1680
      %v1835 = vpack.c.b16 %v1683, %v1681
      %v1836 = vpack.c.b16 %v1686, %v1684
      %v1837 = vpack.c.b16 %v1687, %v1685
      %v1838 = vpack.c.b16 %v1690, %v1688
      %v1839 = vpack.c.b16 %v1691, %v1689
      %v1840 = vpack.c.b16 %v1694, %v1692
      %v1841 = vpack.c.b16 %v1695, %v1693
      %v1842 = vpack.c.b16 %v1698, %v1696
      %v1843 = vpack.c.b16 %v1699, %v1697
      %v1844 = vpack.c.b16 %v1702, %v1700
      %v1845 = vpack.c.b16 %v1703, %v1701
      %v1846 = vpack.c.b16 %v1706, %v1704
      %v1847 = vpack.c.b16 %v1707, %v1705
      %v1848 = vpack.c.b16 %v1710, %v1708
      %v1849 = vpack.c.b16 %v1711, %v1709
      %v1850 = vpack.c.b16 %v1714, %v1712
      %v1851 = vpack.c.b16 %v1715, %v1713
      %v1852 = vpack.c.b16 %v1718, %v1716
      %v1853 = vpack.c.b16 %v1719, %v1717
      %v1854 = vpack.c.b16 %v1722, %v1720
      %v1855 = vpack.c.b16 %v1723, %v1721
      %v1856 = vpack.c.b16 %v1726, %v1724
      %v1857 = vpack.c.b16 %v1727, %v1725
      %v1858 = vpack.c.b16 %v1730, %v1728
      %v1859 = vpack.c.b16 %v1731, %v1729
      %1988 = vmatprep.subr.bf16.mxu0 %v1733
      %1989 = vmatpush1.bf16.msra.mxu0 %v1732
      %1990 = vmatprep.subr.bf16.mxu0 %v1735
      %1991 = vmatpush1.bf16.msra.mxu0 %v1734
      %1992 = vmatprep.subr.bf16.mxu0 %v1737
      %1993 = vmatpush1.bf16.msra.mxu0 %v1736
      %1994 = vmatprep.subr.bf16.mxu0 %v1739
      %1995 = vmatpush1.bf16.msra.mxu0 %v1738
      %1996 = vmatprep.subr.bf16.mxu0 %v1741
      %1997 = vmatpush1.bf16.msra.mxu0 %v1740
      %1998 = vmatprep.subr.bf16.mxu0 %v1743
      %1999 = vmatpush1.bf16.msra.mxu0 %v1742
      %2000 = vmatprep.subr.bf16.mxu0 %v1745
      %2001 = vmatpush1.bf16.msra.mxu0 %v1744
      %2002 = vmatprep.subr.bf16.mxu0 %v1747
      %2003 = vmatpush1.bf16.msra.mxu0 %v1746
      %2004 = vmatprep.subr.bf16.mxu0 %v1749
      %2005 = vmatpush1.bf16.msra.mxu0 %v1748
      %2006 = vmatprep.subr.bf16.mxu0 %v1751
      %2007 = vmatpush1.bf16.msra.mxu0 %v1750
      %2008 = vmatprep.subr.bf16.mxu0 %v1753
      %2009 = vmatpush1.bf16.msra.mxu0 %v1752
      %2010 = vmatprep.subr.bf16.mxu0 %v1755
      %2011 = vmatpush1.bf16.msra.mxu0 %v1754
      %2012 = vmatprep.subr.bf16.mxu0 %v1757
      %2013 = vmatpush1.bf16.msra.mxu0 %v1756
      %2014 = vmatprep.subr.bf16.mxu0 %v1759
      %2015 = vmatpush1.bf16.msra.mxu0 %v1758
      %2016 = vmatprep.subr.bf16.mxu0 %v1761
      %2017 = vmatpush1.bf16.msra.mxu0 %v1760
      %2018 = vmatprep.subr.bf16.mxu0 %v1763
      %2019 = vmatpush1.bf16.msra.mxu0 %v1762
      %2020 = vmatprep.mubr.bf16.mxu0 %v1189
      %2021 = vmatmul.mubr.bf16.gmra.mrb[0].mxu0 %v1188
      %v2022 = vpop.f32.mrb[0].mxu0
      %v2023 = vadd.f32 0.0, %v2022
      %v2024 = vpop.f32.mrb[0].mxu0
      %v2025 = vadd.f32 0.0, %v2024
      %v2026 = vpop.f32.mrb[0].mxu0
      %v2027 = vadd.f32 0.0, %v2026
      %v2028 = vpop.f32.mrb[0].mxu0
      %v2029 = vadd.f32 0.0, %v2028
      %2030 = vmatprep.mubr.bf16.mxu0 %v1197
      %2031 = vmatmul.mubr.bf16.gmra.mrb[0].mxu0 %v1196
      %v2032 = vpop.f32.mrb[0].mxu0
      %v2033 = vadd.f32 0.0, %v2032
      %v2034 = vpop.f32.mrb[0].mxu0
      %v2035 = vadd.f32 0.0, %v2034
      %v2036 = vpop.f32.mrb[0].mxu0
      %v2037 = vadd.f32 0.0, %v2036
      %v2038 = vpop.f32.mrb[0].mxu0
      %v2039 = vadd.f32 0.0, %v2038
      %2040 = vmatprep.mubr.bf16.mxu0 %v1205
      %2041 = vmatmul.mubr.bf16.gmra.mrb[0].mxu0 %v1204
      %v2042 = vpop.f32.mrb[0].mxu0
      %v2043 = vadd.f32 0.0, %v2042
      %v2044 = vpop.f32.mrb[0].mxu0
      %v2045 = vadd.f32 0.0, %v2044
      %v2046 = vpop.f32.mrb[0].mxu0
      %v2047 = vadd.f32 0.0, %v2046
      %v2048 = vpop.f32.mrb[0].mxu0
      %v2049 = vadd.f32 0.0, %v2048
      %2050 = vmatprep.mubr.bf16.mxu0 %v1213
      %2051 = vmatmul.mubr.bf16.gmra.mrb[0].mxu0 %v1212
      %v2052 = vpop.f32.mrb[0].mxu0
      %v2053 = vadd.f32 0.0, %v2052
      %v2054 = vpop.f32.mrb[0].mxu0
      %v2055 = vadd.f32 0.0, %v2054
      %v2056 = vpop.f32.mrb[0].mxu0
      %v2057 = vadd.f32 0.0, %v2056
      %v2058 = vpop.f32.mrb[0].mxu0
      %v2059 = vadd.f32 0.0, %v2058
      %2060 = vdwg.mxu0
      %2061 = vmatprep.subr.bf16.mxu0 %v1765
      %2062 = vmatpush1.bf16.msra.mxu0 %v1764
      %2063 = vmatprep.subr.bf16.mxu0 %v1767
      %2064 = vmatpush1.bf16.msra.mxu0 %v1766
      %2065 = vmatprep.subr.bf16.mxu0 %v1769
      %2066 = vmatpush1.bf16.msra.mxu0 %v1768
      %2067 = vmatprep.subr.bf16.mxu0 %v1771
      %2068 = vmatpush1.bf16.msra.mxu0 %v1770
      %2069 = vmatprep.subr.bf16.mxu0 %v1773
      %2070 = vmatpush1.bf16.msra.mxu0 %v1772
      %2071 = vmatprep.subr.bf16.mxu0 %v1775
      %2072 = vmatpush1.bf16.msra.mxu0 %v1774
      %2073 = vmatprep.subr.bf16.mxu0 %v1777
      %2074 = vmatpush1.bf16.msra.mxu0 %v1776
      %2075 = vmatprep.subr.bf16.mxu0 %v1779
      %2076 = vmatpush1.bf16.msra.mxu0 %v1778
      %2077 = vmatprep.subr.bf16.mxu0 %v1781
      %2078 = vmatpush1.bf16.msra.mxu0 %v1780
      %2079 = vmatprep.subr.bf16.mxu0 %v1783
      %2080 = vmatpush1.bf16.msra.mxu0 %v1782
      %2081 = vmatprep.subr.bf16.mxu0 %v1785
      %2082 = vmatpush1.bf16.msra.mxu0 %v1784
      %2083 = vmatprep.subr.bf16.mxu0 %v1787
      %2084 = vmatpush1.bf16.msra.mxu0 %v1786
      %2085 = vmatprep.subr.bf16.mxu0 %v1789
      %2086 = vmatpush1.bf16.msra.mxu0 %v1788
      %2087 = vmatprep.subr.bf16.mxu0 %v1791
      %2088 = vmatpush1.bf16.msra.mxu0 %v1790
      %2089 = vmatprep.subr.bf16.mxu0 %v1793
      %2090 = vmatpush1.bf16.msra.mxu0 %v1792
      %2091 = vmatprep.subr.bf16.mxu0 %v1795
      %2092 = vmatpush1.bf16.msra.mxu0 %v1794
      %2093 = vmatprep.mubr.bf16.mxu0 %v1191
      %2094 = vmatmul.mubr.bf16.gmra.mrb[0].mxu0 %v1190
      %v2095 = vpop.f32.mrb[0].mxu0
      %v2096 = vadd.f32 %v2023, %v2095
      %v2097 = vpop.f32.mrb[0].mxu0
      %v2098 = vadd.f32 %v2025, %v2097
      %v2099 = vpop.f32.mrb[0].mxu0
      %v2100 = vadd.f32 %v2027, %v2099
      %v2101 = vpop.f32.mrb[0].mxu0
      %v2102 = vadd.f32 %v2029, %v2101
      %2103 = vmatprep.mubr.bf16.mxu0 %v1199
      %2104 = vmatmul.mubr.bf16.gmra.mrb[0].mxu0 %v1198
      %v2105 = vpop.f32.mrb[0].mxu0
      %v2106 = vadd.f32 %v2033, %v2105
      %v2107 = vpop.f32.mrb[0].mxu0
      %v2108 = vadd.f32 %v2035, %v2107
      %v2109 = vpop.f32.mrb[0].mxu0
      %v2110 = vadd.f32 %v2037, %v2109
      %v2111 = vpop.f32.mrb[0].mxu0
      %v2112 = vadd.f32 %v2039, %v2111
      %2113 = vmatprep.mubr.bf16.mxu0 %v1207
      %2114 = vmatmul.mubr.bf16.gmra.mrb[0].mxu0 %v1206
      %v2115 = vpop.f32.mrb[0].mxu0
      %v2116 = vadd.f32 %v2043, %v2115
      %v2117 = vpop.f32.mrb[0].mxu0
      %v2118 = vadd.f32 %v2045, %v2117
      %v2119 = vpop.f32.mrb[0].mxu0
      %v2120 = vadd.f32 %v2047, %v2119
      %v2121 = vpop.f32.mrb[0].mxu0
      %v2122 = vadd.f32 %v2049, %v2121
      %2123 = vmatprep.mubr.bf16.mxu0 %v1215
      %2124 = vmatmul.mubr.bf16.gmra.mrb[0].mxu0 %v1214
      %v2125 = vpop.f32.mrb[0].mxu0
      %v2126 = vadd.f32 %v2053, %v2125
      %v2127 = vpop.f32.mrb[0].mxu0
      %v2128 = vadd.f32 %v2055, %v2127
      %v2129 = vpop.f32.mrb[0].mxu0
      %v2130 = vadd.f32 %v2057, %v2129
      %v2131 = vpop.f32.mrb[0].mxu0
      %v2132 = vadd.f32 %v2059, %v2131
      %2133 = vdwg.mxu0
      %2134 = vmatprep.subr.bf16.mxu0 %v1797
      %2135 = vmatpush1.bf16.msra.mxu0 %v1796
      %2136 = vmatprep.subr.bf16.mxu0 %v1799
      %2137 = vmatpush1.bf16.msra.mxu0 %v1798
      %2138 = vmatprep.subr.bf16.mxu0 %v1801
      %2139 = vmatpush1.bf16.msra.mxu0 %v1800
      %2140 = vmatprep.subr.bf16.mxu0 %v1803
      %2141 = vmatpush1.bf16.msra.mxu0 %v1802
      %2142 = vmatprep.subr.bf16.mxu0 %v1805
      %2143 = vmatpush1.bf16.msra.mxu0 %v1804
      %2144 = vmatprep.subr.bf16.mxu0 %v1807
      %2145 = vmatpush1.bf16.msra.mxu0 %v1806
      %2146 = vmatprep.subr.bf16.mxu0 %v1809
      %2147 = vmatpush1.bf16.msra.mxu0 %v1808
      %2148 = vmatprep.subr.bf16.mxu0 %v1811
      %2149 = vmatpush1.bf16.msra.mxu0 %v1810
      %2150 = vmatprep.subr.bf16.mxu0 %v1813
      %2151 = vmatpush1.bf16.msra.mxu0 %v1812
      %2152 = vmatprep.subr.bf16.mxu0 %v1815
      %2153 = vmatpush1.bf16.msra.mxu0 %v1814
      %2154 = vmatprep.subr.bf16.mxu0 %v1817
      %2155 = vmatpush1.bf16.msra.mxu0 %v1816
      %2156 = vmatprep.subr.bf16.mxu0 %v1819
      %2157 = vmatpush1.bf16.msra.mxu0 %v1818
      %2158 = vmatprep.subr.bf16.mxu0 %v1821
      %2159 = vmatpush1.bf16.msra.mxu0 %v1820
      %2160 = vmatprep.subr.bf16.mxu0 %v1823
      %2161 = vmatpush1.bf16.msra.mxu0 %v1822
      %2162 = vmatprep.subr.bf16.mxu0 %v1825
      %2163 = vmatpush1.bf16.msra.mxu0 %v1824
      %2164 = vmatprep.subr.bf16.mxu0 %v1827
      %2165 = vmatpush1.bf16.msra.mxu0 %v1826
      %2166 = vmatprep.mubr.bf16.mxu0 %v1193
      %2167 = vmatmul.mubr.bf16.gmra.mrb[0].mxu0 %v1192
      %v2168 = vpop.f32.mrb[0].mxu0
      %v2169 = vadd.f32 %v2096, %v2168
      %v2170 = vpop.f32.mrb[0].mxu0
      %v2171 = vadd.f32 %v2098, %v2170
      %v2172 = vpop.f32.mrb[0].mxu0
      %v2173 = vadd.f32 %v2100, %v2172
      %v2174 = vpop.f32.mrb[0].mxu0
      %v2175 = vadd.f32 %v2102, %v2174
      %2176 = vmatprep.mubr.bf16.mxu0 %v1201
      %2177 = vmatmul.mubr.bf16.gmra.mrb[0].mxu0 %v1200
      %v2178 = vpop.f32.mrb[0].mxu0
      %v2179 = vadd.f32 %v2106, %v2178
      %v2180 = vpop.f32.mrb[0].mxu0
      %v2181 = vadd.f32 %v2108, %v2180
      %v2182 = vpop.f32.mrb[0].mxu0
      %v2183 = vadd.f32 %v2110, %v2182
      %v2184 = vpop.f32.mrb[0].mxu0
      %v2185 = vadd.f32 %v2112, %v2184
      %2186 = vmatprep.mubr.bf16.mxu0 %v1209
      %2187 = vmatmul.mubr.bf16.gmra.mrb[0].mxu0 %v1208
      %v2188 = vpop.f32.mrb[0].mxu0
      %v2189 = vadd.f32 %v2116, %v2188
      %v2190 = vpop.f32.mrb[0].mxu0
      %v2191 = vadd.f32 %v2118, %v2190
      %v2192 = vpop.f32.mrb[0].mxu0
      %v2193 = vadd.f32 %v2120, %v2192
      %v2194 = vpop.f32.mrb[0].mxu0
      %v2195 = vadd.f32 %v2122, %v2194
      %2196 = vmatprep.mubr.bf16.mxu0 %v1217
      %2197 = vmatmul.mubr.bf16.gmra.mrb[0].mxu0 %v1216
      %v2198 = vpop.f32.mrb[0].mxu0
      %v2199 = vadd.f32 %v2126, %v2198
      %v2200 = vpop.f32.mrb[0].mxu0
      %v2201 = vadd.f32 %v2128, %v2200
      %v2202 = vpop.f32.mrb[0].mxu0
      %v2203 = vadd.f32 %v2130, %v2202
      %v2204 = vpop.f32.mrb[0].mxu0
      %v2205 = vadd.f32 %v2132, %v2204
      %2206 = vdwg.mxu0
      %2207 = vmatprep.subr.bf16.mxu0 %v1829
      %2208 = vmatpush1.bf16.msra.mxu0 %v1828
      %2209 = vmatprep.subr.bf16.mxu0 %v1831
      %2210 = vmatpush1.bf16.msra.mxu0 %v1830
      %2211 = vmatprep.subr.bf16.mxu0 %v1833
      %2212 = vmatpush1.bf16.msra.mxu0 %v1832
      %2213 = vmatprep.subr.bf16.mxu0 %v1835
      %2214 = vmatpush1.bf16.msra.mxu0 %v1834
      %2215 = vmatprep.subr.bf16.mxu0 %v1837
      %2216 = vmatpush1.bf16.msra.mxu0 %v1836
      %2217 = vmatprep.subr.bf16.mxu0 %v1839
      %2218 = vmatpush1.bf16.msra.mxu0 %v1838
      %2219 = vmatprep.subr.bf16.mxu0 %v1841
      %2220 = vmatpush1.bf16.msra.mxu0 %v1840
      %2221 = vmatprep.subr.bf16.mxu0 %v1843
      %2222 = vmatpush1.bf16.msra.mxu0 %v1842
      %2223 = vmatprep.subr.bf16.mxu0 %v1845
      %2224 = vmatpush1.bf16.msra.mxu0 %v1844
      %2225 = vmatprep.subr.bf16.mxu0 %v1847
      %2226 = vmatpush1.bf16.msra.mxu0 %v1846
      %2227 = vmatprep.subr.bf16.mxu0 %v1849
      %2228 = vmatpush1.bf16.msra.mxu0 %v1848
      %2229 = vmatprep.subr.bf16.mxu0 %v1851
      %2230 = vmatpush1.bf16.msra.mxu0 %v1850
      %2231 = vmatprep.subr.bf16.mxu0 %v1853
      %2232 = vmatpush1.bf16.msra.mxu0 %v1852
      %2233 = vmatprep.subr.bf16.mxu0 %v1855
      %2234 = vmatpush1.bf16.msra.mxu0 %v1854
      %2235 = vmatprep.subr.bf16.mxu0 %v1857
      %2236 = vmatpush1.bf16.msra.mxu0 %v1856
      %2237 = vmatprep.subr.bf16.mxu0 %v1859
      %2238 = vmatpush1.bf16.msra.mxu0 %v1858
      %2239 = vmatprep.mubr.bf16.mxu0 %v1195
      %2240 = vmatmul.mubr.bf16.gmra.mrb[0].mxu0 %v1194
      %v2241 = vpop.f32.mrb[0].mxu0
      %v2242 = vadd.f32 %v2169, %v2241
      %v2243 = vpop.f32.mrb[0].mxu0
      %v2244 = vadd.f32 %v2171, %v2243
      %v2245 = vpop.f32.mrb[0].mxu0
      %v2246 = vadd.f32 %v2173, %v2245
      %v2247 = vpop.f32.mrb[0].mxu0
      %v2248 = vadd.f32 %v2175, %v2247
      %2249 = vmatprep.mubr.bf16.mxu0 %v1203
      %2250 = vmatmul.mubr.bf16.gmra.mrb[0].mxu0 %v1202
      %v2251 = vpop.f32.mrb[0].mxu0
      %v2252 = vadd.f32 %v2179, %v2251
      %v2253 = vpop.f32.mrb[0].mxu0
      %v2254 = vadd.f32 %v2181, %v2253
      %v2255 = vpop.f32.mrb[0].mxu0
      %v2256 = vadd.f32 %v2183, %v2255
      %v2257 = vpop.f32.mrb[0].mxu0
      %v2258 = vadd.f32 %v2185, %v2257
      %2259 = vmatprep.mubr.bf16.mxu0 %v1211
      %2260 = vmatmul.mubr.bf16.gmra.mrb[0].mxu0 %v1210
      %v2261 = vpop.f32.mrb[0].mxu0
      %v2262 = vadd.f32 %v2189, %v2261
      %v2263 = vpop.f32.mrb[0].mxu0
      %v2264 = vadd.f32 %v2191, %v2263
      %v2265 = vpop.f32.mrb[0].mxu0
      %v2266 = vadd.f32 %v2193, %v2265
      %v2267 = vpop.f32.mrb[0].mxu0
      %v2268 = vadd.f32 %v2195, %v2267
      %2269 = vmatprep.mubr.bf16.mxu0 %v1219
      %2270 = vmatmul.mubr.bf16.gmra.mrb[0].mxu0 %v1218
      %v2271 = vpop.f32.mrb[0].mxu0
      %v2272 = vadd.f32 %v2199, %v2271
      %v2273 = vpop.f32.mrb[0].mxu0
      %v2274 = vadd.f32 %v2201, %v2273
      %v2275 = vpop.f32.mrb[0].mxu0
      %v2276 = vadd.f32 %v2203, %v2275
      %v2277 = vpop.f32.mrb[0].mxu0
      %v2278 = vadd.f32 %v2205, %v2277
      %2279 = vdwg.mxu0
      %v2280 = vadd.f32 %v2242, %v2246
      %v2281 = vrot.slane %v2280, 4
      %v2282 = vadd.f32 %v2280, %v2281
      %v2283 = vrot.slane %v2282, 2
      %v2284 = vadd.f32 %v2282, %v2283
      %v2285 = vrot.slane %v2284, 1
      %v2286 = vadd.f32 %v2284, %v2285
      %v2287 = vadd.f32 %v2244, %v2248
      %v2288 = vrot.slane %v2287, 4
      %v2289 = vadd.f32 %v2287, %v2288
      %v2290 = vrot.slane %v2289, 2
      %v2291 = vadd.f32 %v2289, %v2290
      %v2292 = vrot.slane %v2291, 1
      %v2293 = vadd.f32 %v2291, %v2292
      %v2294 = vadd.f32 %v2252, %v2256
      %v2295 = vrot.slane %v2294, 4
      %v2296 = vadd.f32 %v2294, %v2295
      %v2297 = vrot.slane %v2296, 2
      %v2298 = vadd.f32 %v2296, %v2297
      %v2299 = vrot.slane %v2298, 1
      %v2300 = vadd.f32 %v2298, %v2299
      %v2301 = vadd.f32 %v2254, %v2258
      %v2302 = vrot.slane %v2301, 4
      %v2303 = vadd.f32 %v2301, %v2302
      %v2304 = vrot.slane %v2303, 2
      %v2305 = vadd.f32 %v2303, %v2304
      %v2306 = vrot.slane %v2305, 1
      %v2307 = vadd.f32 %v2305, %v2306
      %v2308 = vadd.f32 %v2262, %v2266
      %v2309 = vrot.slane %v2308, 4
      %v2310 = vadd.f32 %v2308, %v2309
      %v2311 = vrot.slane %v2310, 2
      %v2312 = vadd.f32 %v2310, %v2311
      %v2313 = vrot.slane %v2312, 1
      %v2314 = vadd.f32 %v2312, %v2313
      %v2315 = vadd.f32 %v2264, %v2268
      %v2316 = vrot.slane %v2315, 4
      %v2317 = vadd.f32 %v2315, %v2316
      %v2318 = vrot.slane %v2317, 2
      %v2319 = vadd.f32 %v2317, %v2318
      %v2320 = vrot.slane %v2319, 1
      %v2321 = vadd.f32 %v2319, %v2320
      %v2322 = vadd.f32 %v2272, %v2276
      %v2323 = vrot.slane %v2322, 4
      %v2324 = vadd.f32 %v2322, %v2323
      %v2325 = vrot.slane %v2324, 2
      %v2326 = vadd.f32 %v2324, %v2325
      %v2327 = vrot.slane %v2326, 1
      %v2328 = vadd.f32 %v2326, %v2327
      %v2329 = vadd.f32 %v2274, %v2278
      %v2330 = vrot.slane %v2329, 4
      %v2331 = vadd.f32 %v2329, %v2330
      %v2332 = vrot.slane %v2331, 2
      %v2333 = vadd.f32 %v2331, %v2332
      %v2334 = vrot.slane %v2333, 1
      %v2335 = vadd.f32 %v2333, %v2334
      %v2336 = vmul.f32 %v2242, %v2242
      %v2337 = vmul.f32 %v2244, %v2244
      %v2338 = vmul.f32 %v2246, %v2246
      %v2339 = vmul.f32 %v2248, %v2248
      %v2340 = vmul.f32 %v2252, %v2252
      %v2341 = vmul.f32 %v2254, %v2254
      %v2342 = vmul.f32 %v2256, %v2256
      %v2343 = vmul.f32 %v2258, %v2258
      %v2344 = vmul.f32 %v2262, %v2262
      %v2345 = vmul.f32 %v2264, %v2264
      %v2346 = vmul.f32 %v2266, %v2266
      %v2347 = vmul.f32 %v2268, %v2268
      %v2348 = vmul.f32 %v2272, %v2272
      %v2349 = vmul.f32 %v2274, %v2274
      %v2350 = vmul.f32 %v2276, %v2276
      %v2351 = vmul.f32 %v2278, %v2278
      %v2352 = vadd.f32 %v2336, %v2338
      %v2353 = vrot.slane %v2352, 4
      %v2354 = vadd.f32 %v2352, %v2353
      %v2355 = vrot.slane %v2354, 2
      %v2356 = vadd.f32 %v2354, %v2355
      %v2357 = vrot.slane %v2356, 1
      %v2358 = vadd.f32 %v2356, %v2357
      %v2359 = vadd.f32 %v2337, %v2339
      %v2360 = vrot.slane %v2359, 4
      %v2361 = vadd.f32 %v2359, %v2360
      %v2362 = vrot.slane %v2361, 2
      %v2363 = vadd.f32 %v2361, %v2362
      %v2364 = vrot.slane %v2363, 1
      %v2365 = vadd.f32 %v2363, %v2364
      %v2366 = vadd.f32 %v2340, %v2342
      %v2367 = vrot.slane %v2366, 4
      %v2368 = vadd.f32 %v2366, %v2367
      %v2369 = vrot.slane %v2368, 2
      %v2370 = vadd.f32 %v2368, %v2369
      %v2371 = vrot.slane %v2370, 1
      %v2372 = vadd.f32 %v2370, %v2371
      %v2373 = vadd.f32 %v2341, %v2343
      %v2374 = vrot.slane %v2373, 4
      %v2375 = vadd.f32 %v2373, %v2374
      %v2376 = vrot.slane %v2375, 2
      %v2377 = vadd.f32 %v2375, %v2376
      %v2378 = vrot.slane %v2377, 1
      %v2379 = vadd.f32 %v2377, %v2378
      %v2380 = vadd.f32 %v2344, %v2346
      %v2381 = vrot.slane %v2380, 4
      %v2382 = vadd.f32 %v2380, %v2381
      %v2383 = vrot.slane %v2382, 2
      %v2384 = vadd.f32 %v2382, %v2383
      %v2385 = vrot.slane %v2384, 1
      %v2386 = vadd.f32 %v2384, %v2385
      %v2387 = vadd.f32 %v2345, %v2347
      %v2388 = vrot.slane %v2387, 4
      %v2389 = vadd.f32 %v2387, %v2388
      %v2390 = vrot.slane %v2389, 2
      %v2391 = vadd.f32 %v2389, %v2390
      %v2392 = vrot.slane %v2391, 1
      %v2393 = vadd.f32 %v2391, %v2392
      %v2394 = vadd.f32 %v2348, %v2350
      %v2395 = vrot.slane %v2394, 4
      %v2396 = vadd.f32 %v2394, %v2395
      %v2397 = vrot.slane %v2396, 2
      %v2398 = vadd.f32 %v2396, %v2397
      %v2399 = vrot.slane %v2398, 1
      %v2400 = vadd.f32 %v2398, %v2399
      %v2401 = vadd.f32 %v2349, %v2351
      %v2402 = vrot.slane %v2401, 4
      %v2403 = vadd.f32 %v2401, %v2402
      %v2404 = vrot.slane %v2403, 2
      %v2405 = vadd.f32 %v2403, %v2404
      %v2406 = vrot.slane %v2405, 1
      %v2407 = vadd.f32 %v2405, %v2406
      %v2408 = vld [vmem:[%s4] sm:$0xff]
      %v2409 = vld [vmem:[%s4 + $0x8] sm:$0xff]
      %v2410 = vld [vmem:[%s4 + $0x10] sm:$0xff]
      %v2411 = vld [vmem:[%s4 + $0x18] sm:$0xff]
      %v2412 = vld [vmem:[%s4 + $0x20] sm:$0xff]
      %v2413 = vld [vmem:[%s4 + $0x28] sm:$0xff]
      %v2414 = vld [vmem:[%s4 + $0x30] sm:$0xff]
      %v2415 = vld [vmem:[%s4 + $0x38] sm:$0xff]
      %v2416 = vld [vmem:[%s4 + $0x40] sm:$0xff]
      %v2417 = vld [vmem:[%s4 + $0x48] sm:$0xff]
      %v2418 = vld [vmem:[%s4 + $0x50] sm:$0xff]
      %v2419 = vld [vmem:[%s4 + $0x58] sm:$0xff]
      %v2420 = vld [vmem:[%s4 + $0x60] sm:$0xff]
      %v2421 = vld [vmem:[%s4 + $0x68] sm:$0xff]
      %v2422 = vld [vmem:[%s4 + $0x70] sm:$0xff]
      %v2423 = vld [vmem:[%s4 + $0x78] sm:$0xff]
      %v2424 = vld [vmem:[%s4 + $0x80] sm:$0xff]
      %v2425 = vld [vmem:[%s4 + $0x88] sm:$0xff]
      %v2426 = vld [vmem:[%s4 + $0x90] sm:$0xff]
      %v2427 = vld [vmem:[%s4 + $0x98] sm:$0xff]
      %v2428 = vld [vmem:[%s4 + $0xa0] sm:$0xff]
      %v2429 = vld [vmem:[%s4 + $0xa8] sm:$0xff]
      %v2430 = vld [vmem:[%s4 + $0xb0] sm:$0xff]
      %v2431 = vld [vmem:[%s4 + $0xb8] sm:$0xff]
      %v2432 = vld [vmem:[%s4 + $0xc0] sm:$0xff]
      %v2433 = vld [vmem:[%s4 + $0xc8] sm:$0xff]
      %v2434 = vld [vmem:[%s4 + $0xd0] sm:$0xff]
      %v2435 = vld [vmem:[%s4 + $0xd8] sm:$0xff]
      %v2436 = vld [vmem:[%s4 + $0xe0] sm:$0xff]
      %v2437 = vld [vmem:[%s4 + $0xe8] sm:$0xff]
      %v2438 = vld [vmem:[%s4 + $0xf0] sm:$0xff]
      %v2439 = vld [vmem:[%s4 + $0xf8] sm:$0xff]
      %v2440 = vld [vmem:[%s4 + $0x100] sm:$0xff]
      %v2441 = vld [vmem:[%s4 + $0x108] sm:$0xff]
      %v2442 = vld [vmem:[%s4 + $0x110] sm:$0xff]
      %v2443 = vld [vmem:[%s4 + $0x118] sm:$0xff]
      %v2444 = vld [vmem:[%s4 + $0x120] sm:$0xff]
      %v2445 = vld [vmem:[%s4 + $0x128] sm:$0xff]
      %v2446 = vld [vmem:[%s4 + $0x130] sm:$0xff]
      %v2447 = vld [vmem:[%s4 + $0x138] sm:$0xff]
      %v2448 = vld [vmem:[%s4 + $0x140] sm:$0xff]
      %v2449 = vld [vmem:[%s4 + $0x148] sm:$0xff]
      %v2450 = vld [vmem:[%s4 + $0x150] sm:$0xff]
      %v2451 = vld [vmem:[%s4 + $0x158] sm:$0xff]
      %v2452 = vld [vmem:[%s4 + $0x160] sm:$0xff]
      %v2453 = vld [vmem:[%s4 + $0x168] sm:$0xff]
      %v2454 = vld [vmem:[%s4 + $0x170] sm:$0xff]
      %v2455 = vld [vmem:[%s4 + $0x178] sm:$0xff]
      %v2456 = vld [vmem:[%s4 + $0x180] sm:$0xff]
      %v2457 = vld [vmem:[%s4 + $0x188] sm:$0xff]
      %v2458 = vld [vmem:[%s4 + $0x190] sm:$0xff]
      %v2459 = vld [vmem:[%s4 + $0x198] sm:$0xff]
      %v2460 = vld [vmem:[%s4 + $0x1a0] sm:$0xff]
      %v2461 = vld [vmem:[%s4 + $0x1a8] sm:$0xff]
      %v2462 = vld [vmem:[%s4 + $0x1b0] sm:$0xff]
      %v2463 = vld [vmem:[%s4 + $0x1b8] sm:$0xff]
      %v2464 = vld [vmem:[%s4 + $0x1c0] sm:$0xff]
      %v2465 = vld [vmem:[%s4 + $0x1c8] sm:$0xff]
      %v2466 = vld [vmem:[%s4 + $0x1d0] sm:$0xff]
      %v2467 = vld [vmem:[%s4 + $0x1d8] sm:$0xff]
      %v2468 = vld [vmem:[%s4 + $0x1e0] sm:$0xff]
      %v2469 = vld [vmem:[%s4 + $0x1e8] sm:$0xff]
      %v2470 = vld [vmem:[%s4 + $0x1f0] sm:$0xff]
      %v2471 = vld [vmem:[%s4 + $0x1f8] sm:$0xff]
      %vm2480 = vcmask 1041409
      %v2481 = vsel %vm2480, %v2300, %v2286
      %vm2482 = vcmask 1042434
      %v2483 = vsel %vm2482, %v2314, %v2481
      %vm2484 = vcmask 1043459
      %v2485 = vsel %vm2484, %v2328, %v2483
      %v2486 = vsel %vm2480, %v2307, %v2293
      %v2487 = vsel %vm2482, %v2321, %v2486
      %v2488 = vsel %vm2484, %v2335, %v2487
      %2491 = vmatprep.subr.mxu0 %v2409
      %2492 = vmatpush1.msra.mxu0 %v2408
      %2493 = vmatprep.subr.mxu0 %v2411
      %2494 = vmatpush1.msra.mxu0 %v2410
      %2495 = vmatprep.subr.mxu0 %v2413
      %2496 = vmatpush1.msra.mxu0 %v2412
      %2497 = vmatprep.subr.mxu0 %v2415
      %2498 = vmatpush1.msra.mxu0 %v2414
      %2499 = vmatprep.subr.mxu0 %v2417
      %2500 = vmatpush1.msra.mxu0 %v2416
      %2501 = vmatprep.subr.mxu0 %v2419
      %2502 = vmatpush1.msra.mxu0 %v2418
      %2503 = vmatprep.subr.mxu0 %v2421
      %2504 = vmatpush1.msra.mxu0 %v2420
      %2505 = vmatprep.subr.mxu0 %v2423
      %2506 = vmatpush1.msra.mxu0 %v2422
      %2507 = vmatprep.subr.mxu0 %v2425
      %2508 = vmatpush1.msra.mxu0 %v2424
      %2509 = vmatprep.subr.mxu0 %v2427
      %2510 = vmatpush1.msra.mxu0 %v2426
      %2511 = vmatprep.subr.mxu0 %v2429
      %2512 = vmatpush1.msra.mxu0 %v2428
      %2513 = vmatprep.subr.mxu0 %v2431
      %2514 = vmatpush1.msra.mxu0 %v2430
      %2515 = vmatprep.subr.mxu0 %v2433
      %2516 = vmatpush1.msra.mxu0 %v2432
      %2517 = vmatprep.subr.mxu0 %v2435
      %2518 = vmatpush1.msra.mxu0 %v2434
      %2519 = vmatprep.subr.mxu0 %v2437
      %2520 = vmatpush1.msra.mxu0 %v2436
      %2521 = vmatprep.subr.mxu0 %v2439
      %2522 = vmatpush1.msra.mxu0 %v2438
      %2523 = vmatprep.subr.mxu0 %v2441
      %2524 = vmatpush1.msra.mxu0 %v2440
      %2525 = vmatprep.subr.mxu0 %v2443
      %2526 = vmatpush1.msra.mxu0 %v2442
      %2527 = vmatprep.subr.mxu0 %v2445
      %2528 = vmatpush1.msra.mxu0 %v2444
      %2529 = vmatprep.subr.mxu0 %v2447
      %2530 = vmatpush1.msra.mxu0 %v2446
      %2531 = vmatprep.subr.mxu0 %v2449
      %2532 = vmatpush1.msra.mxu0 %v2448
      %2533 = vmatprep.subr.mxu0 %v2451
      %2534 = vmatpush1.msra.mxu0 %v2450
      %2535 = vmatprep.subr.mxu0 %v2453
      %2536 = vmatpush1.msra.mxu0 %v2452
      %2537 = vmatprep.subr.mxu0 %v2455
      %2538 = vmatpush1.msra.mxu0 %v2454
      %2539 = vmatprep.subr.mxu0 %v2457
      %2540 = vmatpush1.msra.mxu0 %v2456
      %2541 = vmatprep.subr.mxu0 %v2459
      %2542 = vmatpush1.msra.mxu0 %v2458
      %2543 = vmatprep.subr.mxu0 %v2461
      %2544 = vmatpush1.msra.mxu0 %v2460
      %2545 = vmatprep.subr.mxu0 %v2463
      %2546 = vmatpush1.msra.mxu0 %v2462
      %2547 = vmatprep.subr.mxu0 %v2465
      %2548 = vmatpush1.msra.mxu0 %v2464
      %2549 = vmatprep.subr.mxu0 %v2467
      %2550 = vmatpush1.msra.mxu0 %v2466
      %2551 = vmatprep.subr.mxu0 %v2469
      %2552 = vmatpush1.msra.mxu0 %v2468
      %2553 = vmatprep.subr.mxu0 %v2471
      %2554 = vmatpush1.msra.mxu0 %v2470
      %2555 = vmatprep.mubr.f32.mxu0 %v2488
      %2556 = vmatmul.mubr.f32.gmra.mrb[0].mxu0 %v2485
      %v2557 = vpop.f32.mrb[0].mxu0
      %v2558 = vadd.f32 0.0, %v2557
      %v2559 = vpop.f32.mrb[0].mxu0
      %v2560 = vadd.f32 0.0, %v2559
      %2561 = vdwg.mxu0
      %v2570 = vsel %vm2480, %v2372, %v2358
      %v2571 = vsel %vm2482, %v2386, %v2570
      %v2572 = vsel %vm2484, %v2400, %v2571
      %v2573 = vsel %vm2480, %v2379, %v2365
      %v2574 = vsel %vm2482, %v2393, %v2573
      %v2575 = vsel %vm2484, %v2407, %v2574
      %2578 = vmatprep.subr.mxu0 %v2409
      %2579 = vmatpush1.msra.mxu0 %v2408
      %2580 = vmatprep.subr.mxu0 %v2411
      %2581 = vmatpush1.msra.mxu0 %v2410
      %2582 = vmatprep.subr.mxu0 %v2413
      %2583 = vmatpush1.msra.mxu0 %v2412
      %2584 = vmatprep.subr.mxu0 %v2415
      %2585 = vmatpush1.msra.mxu0 %v2414
      %2586 = vmatprep.subr.mxu0 %v2417
      %2587 = vmatpush1.msra.mxu0 %v2416
      %2588 = vmatprep.subr.mxu0 %v2419
      %2589 = vmatpush1.msra.mxu0 %v2418
      %2590 = vmatprep.subr.mxu0 %v2421
      %2591 = vmatpush1.msra.mxu0 %v2420
      %2592 = vmatprep.subr.mxu0 %v2423
      %2593 = vmatpush1.msra.mxu0 %v2422
      %2594 = vmatprep.subr.mxu0 %v2425
      %2595 = vmatpush1.msra.mxu0 %v2424
      %2596 = vmatprep.subr.mxu0 %v2427
      %2597 = vmatpush1.msra.mxu0 %v2426
      %2598 = vmatprep.subr.mxu0 %v2429
      %2599 = vmatpush1.msra.mxu0 %v2428
      %2600 = vmatprep.subr.mxu0 %v2431
      %2601 = vmatpush1.msra.mxu0 %v2430
      %2602 = vmatprep.subr.mxu0 %v2433
      %2603 = vmatpush1.msra.mxu0 %v2432
      %2604 = vmatprep.subr.mxu0 %v2435
      %2605 = vmatpush1.msra.mxu0 %v2434
      %2606 = vmatprep.subr.mxu0 %v2437
      %2607 = vmatpush1.msra.mxu0 %v2436
      %2608 = vmatprep.subr.mxu0 %v2439
      %2609 = vmatpush1.msra.mxu0 %v2438
      %2610 = vmatprep.subr.mxu0 %v2441
      %2611 = vmatpush1.msra.mxu0 %v2440
      %2612 = vmatprep.subr.mxu0 %v2443
      %2613 = vmatpush1.msra.mxu0 %v2442
      %2614 = vmatprep.subr.mxu0 %v2445
      %2615 = vmatpush1.msra.mxu0 %v2444
      %2616 = vmatprep.subr.mxu0 %v2447
      %2617 = vmatpush1.msra.mxu0 %v2446
      %2618 = vmatprep.subr.mxu0 %v2449
      %2619 = vmatpush1.msra.mxu0 %v2448
      %2620 = vmatprep.subr.mxu0 %v2451
      %2621 = vmatpush1.msra.mxu0 %v2450
      %2622 = vmatprep.subr.mxu0 %v2453
      %2623 = vmatpush1.msra.mxu0 %v2452
      %2624 = vmatprep.subr.mxu0 %v2455
      %2625 = vmatpush1.msra.mxu0 %v2454
      %2626 = vmatprep.subr.mxu0 %v2457
      %2627 = vmatpush1.msra.mxu0 %v2456
      %2628 = vmatprep.subr.mxu0 %v2459
      %2629 = vmatpush1.msra.mxu0 %v2458
      %2630 = vmatprep.subr.mxu0 %v2461
      %2631 = vmatpush1.msra.mxu0 %v2460
      %2632 = vmatprep.subr.mxu0 %v2463
      %2633 = vmatpush1.msra.mxu0 %v2462
      %2634 = vmatprep.subr.mxu0 %v2465
      %2635 = vmatpush1.msra.mxu0 %v2464
      %2636 = vmatprep.subr.mxu0 %v2467
      %2637 = vmatpush1.msra.mxu0 %v2466
      %2638 = vmatprep.subr.mxu0 %v2469
      %2639 = vmatpush1.msra.mxu0 %v2468
      %2640 = vmatprep.subr.mxu0 %v2471
      %2641 = vmatpush1.msra.mxu0 %v2470
      %2642 = vmatprep.mubr.f32.mxu0 %v2575
      %2643 = vmatmul.mubr.f32.gmra.mrb[0].mxu0 %v2572
      %v2644 = vpop.f32.mrb[0].mxu0
      %v2645 = vadd.f32 0.0, %v2644
      %v2646 = vpop.f32.mrb[0].mxu0
      %v2647 = vadd.f32 0.0, %v2646
      %2648 = vdwg.mxu0
      %v2649 = vmul.f32 %v2558, %v2558
      %v2650 = vmul.f32 %v2560, %v2560
      %v2651 = vsub.f32 %v2645, %v2649
      %v2652 = vsub.f32 %v2647, %v2650
      %v2653 = vadd.f32 %v2651, 1e-05
      %v2654 = vadd.f32 %v2652, 1e-05
      %v2655 = vrsqrt.pop %v2653
      %v2656 = vrsqrt.pop %v2654
      %v2659 = vcombine.low %v2558, %v2560
      %v2661 = vunpack.c.l.s4 1966171168
      %v2662 = vunpack.c.0.s8 %v2661
      %v2663 = vlaneseq
      %v2664 = vshrl.u32 %v2663, 7
      %v2665 = vsub.s32 %v2662, %v2664
      %v2666 = vrot.slane %v2659, %v2665
      %v2667 = vcombine.high %v2666, %v2666
      %v2669 = vunpack.c.l.s4 1966171168
      %v2670 = vunpack.c.0.s8 %v2669
      %v2671 = vlaneseq
      %v2672 = vshrl.u32 %v2671, 7
      %v2673 = vsub.s32 %v2670, %v2672
      %v2674 = vrot.slane %v2666, %v2673
      %v2676 = vunpack.c.l.s4 1966171168
      %v2677 = vunpack.c.0.s8 %v2676
      %v2678 = vlaneseq
      %v2679 = vshrl.u32 %v2678, 7
      %v2680 = vsub.s32 %v2677, %v2679
      %v2681 = vrot.slane %v2667, %v2680
      %v2682 = vcombine.high %v2674, %v2674
      %v2683 = vcombine.high %v2681, %v2681
      %v2684 = vlaneseq
      %v2685 = vshrl.u32 %v2684, 7
      %v2686 = vsub.s32 0, %v2685
      %v2687 = vrot.slane %v2674, %v2686
      %v2688 = vlaneseq
      %v2689 = vshrl.u32 %v2688, 7
      %v2690 = vsub.s32 1, %v2689
      %v2691 = vrot.slane %v2674, %v2690
      %v2692 = vlaneseq
      %v2693 = vshrl.u32 %v2692, 7
      %v2694 = vsub.s32 0, %v2693
      %v2695 = vrot.slane %v2681, %v2694
      %v2696 = vlaneseq
      %v2697 = vshrl.u32 %v2696, 7
      %v2698 = vsub.s32 1, %v2697
      %v2699 = vrot.slane %v2681, %v2698
      %v2700 = vlaneseq
      %v2701 = vshrl.u32 %v2700, 7
      %v2702 = vsub.s32 0, %v2701
      %v2703 = vrot.slane %v2682, %v2702
      %v2704 = vlaneseq
      %v2705 = vshrl.u32 %v2704, 7
      %v2706 = vsub.s32 1, %v2705
      %v2707 = vrot.slane %v2682, %v2706
      %v2708 = vlaneseq
      %v2709 = vshrl.u32 %v2708, 7
      %v2710 = vsub.s32 0, %v2709
      %v2711 = vrot.slane %v2683, %v2710
      %v2712 = vlaneseq
      %v2713 = vshrl.u32 %v2712, 7
      %v2714 = vsub.s32 1, %v2713
      %v2715 = vrot.slane %v2683, %v2714
      %v2724 = vsub.f32 %v2242, %v2687
      %v2725 = vsub.f32 %v2244, %v2691
      %v2726 = vsub.f32 %v2246, %v2687
      %v2727 = vsub.f32 %v2248, %v2691
      %v2728 = vsub.f32 %v2252, %v2695
      %v2729 = vsub.f32 %v2254, %v2699
      %v2730 = vsub.f32 %v2256, %v2695
      %v2731 = vsub.f32 %v2258, %v2699
      %v2732 = vsub.f32 %v2262, %v2703
      %v2733 = vsub.f32 %v2264, %v2707
      %v2734 = vsub.f32 %v2266, %v2703
      %v2735 = vsub.f32 %v2268, %v2707
      %v2736 = vsub.f32 %v2272, %v2711
      %v2737 = vsub.f32 %v2274, %v2715
      %v2738 = vsub.f32 %v2276, %v2711
      %v2739 = vsub.f32 %v2278, %v2715
      %v2742 = vcombine.low %v2655, %v2656
      %v2744 = vunpack.c.l.s4 1966171168
      %v2745 = vunpack.c.0.s8 %v2744
      %v2746 = vlaneseq
      %v2747 = vshrl.u32 %v2746, 7
      %v2748 = vsub.s32 %v2745, %v2747
      %v2749 = vrot.slane %v2742, %v2748
      %v2750 = vcombine.high %v2749, %v2749
      %v2752 = vunpack.c.l.s4 1966171168
      %v2753 = vunpack.c.0.s8 %v2752
      %v2754 = vlaneseq
      %v2755 = vshrl.u32 %v2754, 7
      %v2756 = vsub.s32 %v2753, %v2755
      %v2757 = vrot.slane %v2749, %v2756
      %v2759 = vunpack.c.l.s4 1966171168
      %v2760 = vunpack.c.0.s8 %v2759
      %v2761 = vlaneseq
      %v2762 = vshrl.u32 %v2761, 7
      %v2763 = vsub.s32 %v2760, %v2762
      %v2764 = vrot.slane %v2750, %v2763
      %v2765 = vcombine.high %v2757, %v2757
      %v2766 = vcombine.high %v2764, %v2764
      %v2767 = vlaneseq
      %v2768 = vshrl.u32 %v2767, 7
      %v2769 = vsub.s32 0, %v2768
      %v2770 = vrot.slane %v2757, %v2769
      %v2771 = vlaneseq
      %v2772 = vshrl.u32 %v2771, 7
      %v2773 = vsub.s32 1, %v2772
      %v2774 = vrot.slane %v2757, %v2773
      %v2775 = vlaneseq
      %v2776 = vshrl.u32 %v2775, 7
      %v2777 = vsub.s32 0, %v2776
      %v2778 = vrot.slane %v2764, %v2777
      %v2779 = vlaneseq
      %v2780 = vshrl.u32 %v2779, 7
      %v2781 = vsub.s32 1, %v2780
      %v2782 = vrot.slane %v2764, %v2781
      %v2783 = vlaneseq
      %v2784 = vshrl.u32 %v2783, 7
      %v2785 = vsub.s32 0, %v2784
      %v2786 = vrot.slane %v2765, %v2785
      %v2787 = vlaneseq
      %v2788 = vshrl.u32 %v2787, 7
      %v2789 = vsub.s32 1, %v2788
      %v2790 = vrot.slane %v2765, %v2789
      %v2791 = vlaneseq
      %v2792 = vshrl.u32 %v2791, 7
      %v2793 = vsub.s32 0, %v2792
      %v2794 = vrot.slane %v2766, %v2793
      %v2795 = vlaneseq
      %v2796 = vshrl.u32 %v2795, 7
      %v2797 = vsub.s32 1, %v2796
      %v2798 = vrot.slane %v2766, %v2797
      %v2807 = vmul.f32 %v2724, %v2770
      %v2808 = vmul.f32 %v2725, %v2774
      %v2809 = vmul.f32 %v2726, %v2770
      %v2810 = vmul.f32 %v2727, %v2774
      %v2811 = vmul.f32 %v2728, %v2778
      %v2812 = vmul.f32 %v2729, %v2782
      %v2813 = vmul.f32 %v2730, %v2778
      %v2814 = vmul.f32 %v2731, %v2782
      %v2815 = vmul.f32 %v2732, %v2786
      %v2816 = vmul.f32 %v2733, %v2790
      %v2817 = vmul.f32 %v2734, %v2786
      %v2818 = vmul.f32 %v2735, %v2790
      %v2819 = vmul.f32 %v2736, %v2794
      %v2820 = vmul.f32 %v2737, %v2798
      %v2821 = vmul.f32 %v2738, %v2794
      %v2822 = vmul.f32 %v2739, %v2798
      %2823 = vst [vmem:[%s231] sm:$0xff] %v2807
      %2824 = vst [vmem:[%s231 + $0x8] sm:$0xff] %v2808
      %2825 = vst [vmem:[%s231 + $0x10] sm:$0xff] %v2809
      %2826 = vst [vmem:[%s231 + $0x18] sm:$0xff] %v2810
      %2827 = vst [vmem:[%s231 + $0x20] sm:$0xff] %v2811
      %2828 = vst [vmem:[%s231 + $0x28] sm:$0xff] %v2812
      %2829 = vst [vmem:[%s231 + $0x30] sm:$0xff] %v2813
      %2830 = vst [vmem:[%s231 + $0x38] sm:$0xff] %v2814
      %2831 = vst [vmem:[%s231 + $0x40] sm:$0xff] %v2815
      %2832 = vst [vmem:[%s231 + $0x48] sm:$0xff] %v2816
      %2833 = vst [vmem:[%s231 + $0x50] sm:$0xff] %v2817
      %2834 = vst [vmem:[%s231 + $0x58] sm:$0xff] %v2818
      %2835 = vst [vmem:[%s231 + $0x60] sm:$0xff] %v2819
      %2836 = vst [vmem:[%s231 + $0x68] sm:$0xff] %v2820
      %2837 = vst [vmem:[%s231 + $0x70] sm:$0xff] %v2821
      %2838 = vst [vmem:[%s231 + $0x78] sm:$0xff] %v2822
      %s2839 = smul.u32 4, %s16
      %p2840 = scmp.lt.s32.totalorder %s2839, 7
      %s2841 = scalar_select %p2840, %s2839, 7
      %s2842 = smul.addr %s2841, 4
      %s2843 = smul.addr %s2842, 8
      %s2844 = scalar_lea.vmem %s5, %s2843
      // Predicated region
      $region41: #{decoder_block_forward.1} parent=39 // pred_check
        %p2845 = pneg %p144
      $region42: #{decoder_block_forward.1} parent=39 // pred_check_branch
        %2847 = sbr.rel (%p2845) target = $region44
      $region43: #{decoder_block_forward.1} parent=39 // pred_region
        %s2848 = smul.u32 4, %s16
      $region44: #{decoder_block_forward.1} parent=39 // pred_fallthru
        _
    $region40: #{decoder_block_forward.1} parent=5 // pred_fallthru
      _
    %p2849 = scmp.le.s32.totalorder 2, %s11
    // Predicated region
    $region45: #{decoder_block_forward.1} parent=5 // pred_check
      %p2850 = pneg %p2849
    $region46: #{decoder_block_forward.1} parent=5 // pred_check_branch
      %2852 = sbr.rel (%p2850) target = $region48
    $region47: #{decoder_block_forward.1} parent=5 // pred_region
      %s2853 = ssub.s32 %s11, 2
      // Predicated region
      $region49: #{decoder_block_forward.1} parent=47 // pred_check
        %p2854 = pneg %p150
      $region50: #{decoder_block_forward.1} parent=47 // pred_check_branch
        %2856 = sbr.rel (%p2854) target = $region52
      $region51: #{decoder_block_forward.1} parent=47 // pred_region
        %s2857 = smul.u32 4, %s17
        %p2858 = scmp.lt.s32.totalorder %s2857, 7
        %s2859 = scalar_select %p2858, %s2857, 7
        %s2860 = smul.addr %s2859, 4
        %s2861 = smul.addr %s2860, 8
        %s2862 = scalar_lea.vmem %s5, %s2861
      $region52: #{decoder_block_forward.1} parent=47 // pred_fallthru
        _
    $region48: #{decoder_block_forward.1} parent=5 // pred_fallthru
      _
  $region6: #{decoder_block_forward.1} parent=0 // loop_footer
    %s15 = sadd.s32 1, %s11
  $region7: #{decoder_block_forward.1} parent=0 // loop_footer_branch
    %10 = sbr.rel target = $region3
  $region8: #{decoder_block_forward.1} parent=0 // loop_exit
    _

</llo_original>
